<compile_context>
chip_gen: v6e
topology: v6e:2x2x1
jax: 0.10.0
libtpu: 0.0.40
codegen_flags: <defaults>
</compile_context>

<pallas_src>
import functools

import jax
import jax.numpy as jnp
from jax.experimental import pallas as pl
from jax.experimental.pallas import tpu as pltpu


# ----------------------------------------------------------------------------
# Pallas kernel: BB batch elements per grid step.
# ----------------------------------------------------------------------------
def _rab_kernel(x_ref, wqkv_ref, wo_ref, *rest,
                heads, dim, eps, use_mlp, ff_chunk, approx_recip):
    if use_mlp:
        (w_in_ref, b_in_ref, w_out_ref, b_out_ref,
         gamma_ref, beta_ref, y_ref) = rest
    else:
        gamma_ref, beta_ref, y_ref = rest

    x = x_ref[...]                                   # (BB, t, embd), native dtype
    bb, t, embd = x.shape
    m = bb * t

    xr = x.reshape(m, embd)
    xf = xr.astype(jnp.float32)                      # residual / LayerNorm path
    xb = xr.astype(jnp.bfloat16)                     # MXU operand

    acc = jnp.zeros((m, embd), jnp.float32)          # attention + MLP residual

    # --- attention: one head at a time, folded into the output projection ---
    for h in range(heads):
        # per-head fused [q|k|v] projection; attention scale is folded into the
        # q columns of the repacked weight (done in the jitted wrapper).
        qkv_h = jnp.dot(xb, wqkv_ref[h],
                        preferred_element_type=jnp.float32)       # (m, 3*dim)
        q = qkv_h[:, :dim].astype(jnp.bfloat16).reshape(bb, t, dim)
        k = qkv_h[:, dim:2 * dim].astype(jnp.bfloat16).reshape(bb, t, dim)
        v = qkv_h[:, 2 * dim:].astype(jnp.bfloat16).reshape(bb, t, dim)

        # scores, batched over the BB axis (batch elements never mix)
        s = jnp.einsum("bid,bjd->bij", q, k,
                       preferred_element_type=jnp.float32)        # (bb, t, t)
        s = s - jnp.max(s, axis=-1, keepdims=True)
        e = jnp.exp(s)
        denom = jnp.sum(e, axis=-1, keepdims=True)
        if approx_recip:
            p = e * pl.reciprocal(denom, approx=True)   # EUP slot; ~1e-3 rel err
        else:
            p = e / denom
        o = jnp.einsum("bij,bjd->bid", p.astype(jnp.bfloat16), v,
                       preferred_element_type=jnp.float32)        # (bb, t, dim)

        # output projection folded into the loop: no concatenate, and this
        # head's s/e/p/o tensors die before the next head starts.
        acc = acc + jnp.dot(o.reshape(m, dim).astype(jnp.bfloat16), wo_ref[h],
                            preferred_element_type=jnp.float32)   # (m, embd)

    # --- MLP (ff dim chunked so hmid is never fully resident) ----------------
    if use_mlp:
        ffdim = w_in_ref.shape[1]
        for c0 in range(0, ffdim, ff_chunk):
            c1 = c0 + ff_chunk
            hmid = (jnp.dot(xb, w_in_ref[:, c0:c1],
                            preferred_element_type=jnp.float32)
                    + b_in_ref[:, c0:c1])
            # exact (erf-based) GELU, matching torch.nn.GELU() default
            hmid = 0.5 * hmid * (1.0 + jax.lax.erf(hmid * 0.7071067811865476))
            acc = acc + jnp.dot(hmid.astype(jnp.bfloat16), w_out_ref[c0:c1, :],
                                preferred_element_type=jnp.float32)
        acc = acc + b_out_ref[...]

    # --- post-residual LayerNorm (torch default eps=1e-5, biased variance) ---
    z = xf + acc
    mean = jnp.mean(z, axis=-1, keepdims=True)
    var = jnp.mean((z - mean) ** 2, axis=-1, keepdims=True)
    y = (z - mean) * jax.lax.rsqrt(var + eps) * gamma_ref[...] + beta_ref[...]
    y_ref[...] = y.reshape(bb, t, embd).astype(y_ref.dtype)


# ----------------------------------------------------------------------------
# Wrapper helpers
# ----------------------------------------------------------------------------
def _pick_block_batch(b, t, target_rows=256):
    """Largest divisor of b with bb*t <= ~target_rows (fills the MXU M dim)."""
    cap = max(1, min(b, max(1, target_rows // max(t, 1))))
    bb = 1
    for d in range(1, cap + 1):
        if b % d == 0:
            bb = d
    return bb


def _pick_ff_chunk(ffdim):
    if ffdim <= 2048:
        return ffdim
    for cand in (2048, 1536, 1024, 512, 256, 128):
        if ffdim % cand == 0:
            return cand
    return ffdim


def _vmem_limit_bytes():
    try:
        kind = jax.devices()[0].device_kind.lower()
    except Exception:
        kind = ""
    if "v7" in kind:
        return 48 * 1024 * 1024     # v7x: 64 MiB/TC physical -> leave headroom
    return 100 * 1024 * 1024        # v5e/v6e: 128 MiB physical VMEM


# ----------------------------------------------------------------------------
# Wrapper: weight re-layout (folded into the same jit) + pallas_call.
# ----------------------------------------------------------------------------
def residual_attention_block(x, params, *, heads, dim, ff_multi, eps=1e-5,
                             approx_recip=True):
    b, t, embd = x.shape
    scale = float(dim) ** (-0.5)
    use_mlp = ff_multi > 0
    bb = _pick_block_batch(b, t)

    # to_qkv weight: torch (3*dim*heads, embd); row index = k*dim*heads + d*heads + h
    # (from rearrange 'b t (k d h)').  Repack to (heads, embd, 3*dim) so the head
    # axis is a leading axis; per head the columns are [q | k | v], scale folded
    # into the q columns.
    w = params["w_qkv"].reshape(3, dim, heads, embd)              # [k, d, h, e]
    w = jnp.transpose(w, (2, 3, 0, 1)).reshape(heads, embd, 3 * dim)
    scale_vec = jnp.concatenate([jnp.full((dim,), scale, jnp.float32),
                                 jnp.ones((2 * dim,), jnp.float32)])
    wqkv = (w * scale_vec).astype(jnp.bfloat16)                   # (h, embd, 3d)

    # attn_out weight: torch (embd, dim*heads); W.T rows are (h, d)-ordered,
    # matching the per-head accumulation order in the kernel.
    wo = params["w_attn_out"].T.reshape(heads, dim, embd).astype(jnp.bfloat16)

    gamma = params["gamma"].reshape(1, embd).astype(jnp.float32)
    beta = params["beta"].reshape(1, embd).astype(jnp.float32)

    def const_spec(shape):
        return pl.BlockSpec(shape, lambda i, n=len(shape): (0,) * n)

    in_specs = [
        pl.BlockSpec((bb, t, embd), lambda i: (i, 0, 0)),
        const_spec((heads, embd, 3 * dim)),
        const_spec((heads, dim, embd)),
    ]
    inputs = [x, wqkv, wo]    # x in its native dtype (no forced f32 upcast)

    ff_chunk = 0
    if use_mlp:
        ffdim = embd * ff_multi
        ff_chunk = _pick_ff_chunk(ffdim)
        w_in = params["w_mlp_in"].T.astype(jnp.bfloat16)          # (embd, ffdim)
        b_in = params["b_mlp_in"].reshape(1, ffdim).astype(jnp.float32)
        w_out = params["w_mlp_out"].T.astype(jnp.bfloat16)        # (ffdim, embd)
        b_out = params["b_mlp_out"].reshape(1, embd).astype(jnp.float32)
        in_specs += [const_spec((embd, ffdim)), const_spec((1, ffdim)),
                     const_spec((ffdim, embd)), const_spec((1, embd))]
        inputs += [w_in, b_in, w_out, b_out]

    in_specs += [const_spec((1, embd)), const_spec((1, embd))]
    inputs += [gamma, beta]

    kernel = functools.partial(
        _rab_kernel, heads=heads, dim=dim, eps=eps, use_mlp=use_mlp,
        ff_chunk=ff_chunk, approx_recip=approx_recip)

    return pl.pallas_call(
        kernel,
        out_shape=jax.ShapeDtypeStruct((b, t, embd), x.dtype),
        grid_spec=pltpu.PrefetchScalarGridSpec(
            num_scalar_prefetch=0,
            grid=(b // bb,),
            in_specs=in_specs,
            out_specs=pl.BlockSpec((bb, t, embd), lambda i: (i, 0, 0)),
        ),
        compiler_params=pltpu.CompilerParams(
            dimension_semantics=("parallel",),
            vmem_limit_bytes=_vmem_limit_bytes(),
        ),
    )(*inputs)


# ----------------------------------------------------------------------------
# Pure-JAX f32 reference (mirrors the PyTorch forward)
# ----------------------------------------------------------------------------
def reference(x, params, *, heads, dim, ff_multi, eps=1e-5):
    b, t, embd = x.shape
    qkv = x @ params["w_qkv"].T                               # (b, t, 3*d*h)
    qkv = qkv.reshape(b, t, 3, dim, heads)
    qkv = jnp.transpose(qkv, (2, 0, 4, 1, 3))                 # (k, b, h, t, d)
    q, k, v = qkv[0], qkv[1], qkv[2]
    dots = jnp.einsum("bhid,bhjd->bhij", q, k) * (dim ** -0.5)
    attn = jax.nn.softmax(dots, axis=-1)
    out = jnp.einsum("bhij,bhjd->bhid", attn, v)
    out = jnp.transpose(out, (0, 2, 1, 3)).reshape(b, t, heads * dim)
    residual = out @ params["w_attn_out"].T
    if ff_multi > 0:
        h1 = x @ params["w_mlp_in"].T + params["b_mlp_in"]
        h1 = 0.5 * h1 * (1.0 + jax.scipy.special.erf(h1 * 0.7071067811865476))
        residual = residual + h1 @ params["w_mlp_out"].T + params["b_mlp_out"]
    z = x + residual
    mean = z.mean(-1, keepdims=True)
    var = ((z - mean) ** 2).mean(-1, keepdims=True)
    return (z - mean) / jnp.sqrt(var + eps) * params["gamma"] + params["beta"]


# ----------------------------------------------------------------------------
if __name__ == "__main__":
    # Small shapes consistent with the module: x is (batch, seq, embd).
    B, T, EMBD = 2, 8, 32
    DIM, HEADS, FF = 8, 4, 2

    key = jax.random.PRNGKey(0)
    keys = jax.random.split(key, 8)
    gk, bk = jax.random.split(keys[7])

    params = {
        "w_qkv": 0.05 * jax.random.normal(keys[0], (3 * DIM * HEADS, EMBD), jnp.float32),
        "w_attn_out": 0.05 * jax.random.normal(keys[1], (EMBD, DIM * HEADS), jnp.float32),
        "w_mlp_in": 0.05 * jax.random.normal(keys[2], (EMBD * FF, EMBD), jnp.float32),
        "b_mlp_in": 0.05 * jax.random.normal(keys[3], (EMBD * FF,), jnp.float32),
        "w_mlp_out": 0.05 * jax.random.normal(keys[4], (EMBD, EMBD * FF), jnp.float32),
        "b_mlp_out": 0.05 * jax.random.normal(keys[5], (EMBD,), jnp.float32),
        "gamma": 1.0 + 0.1 * jax.random.normal(gk, (EMBD,), jnp.float32),
        "beta": 0.1 * jax.random.normal(bk, (EMBD,), jnp.float32),
    }
    x = jax.random.normal(keys[6], (B, T, EMBD), jnp.float32)

    # attention + MLP path
    run = jax.jit(lambda xx, pp: residual_attention_block(
        xx, pp, heads=HEADS, dim=DIM, ff_multi=FF))
    y = jax.block_until_ready(run(x, params))
    y_ref = reference(x, params, heads=HEADS, dim=DIM, ff_multi=FF)
    # bf16 MXU operands (f32 accumulation) -> tolerance relaxed vs. pure-f32.
    assert jnp.allclose(y, y_ref, atol=2e-2, rtol=2e-2), "output mismatch (mlp)"

    # attention-only path (ff_multi = 0)
    run0 = jax.jit(lambda xx, pp: residual_attention_block(
        xx, pp, heads=HEADS, dim=DIM, ff_multi=0))
    y0 = jax.block_until_ready(run0(x, params))
    y0_ref = reference(x, params, heads=HEADS, dim=DIM, ff_multi=0)
    assert jnp.allclose(y0, y0_ref, atol=2e-2, rtol=2e-2), "output mismatch (no mlp)"

    print("KERNEL_OK")
</pallas_src>

<mosaic_0001>
module attributes {stable_mosaic.version = 11 : i64} {
  func.func @_rab_kernel(%arg0: i32, %arg1: memref<2x8x32xf32, #tpu.memory_space<vmem>>, %arg2: memref<4x32x24xbf16, #tpu.memory_space<vmem>>, %arg3: memref<4x8x32xbf16, #tpu.memory_space<vmem>>, %arg4: memref<32x64xbf16, #tpu.memory_space<vmem>>, %arg5: memref<1x64xf32, #tpu.memory_space<vmem>>, %arg6: memref<64x32xbf16, #tpu.memory_space<vmem>>, %arg7: memref<1x32xf32, #tpu.memory_space<vmem>>, %arg8: memref<1x32xf32, #tpu.memory_space<vmem>>, %arg9: memref<1x32xf32, #tpu.memory_space<vmem>>, %arg10: memref<2x8x32xf32, #tpu.memory_space<vmem>>) attributes {dimension_semantics = [#tpu.dimension_semantics<parallel>], iteration_bounds = array<i64: 1>, scalar_prefetch = 0 : i64, scratch_operands = 0 : i64, tpu.core_type = #tpu.core_type<tc>, window_params = [{transform_indices = @transform_0, window_bounds = array<i64: 2, 8, 32>}, {pipeline_mode = #tpu.pipeline_mode<synchronous>, transform_indices = @transform_1, window_bounds = array<i64: 4, 32, 24>}, {pipeline_mode = #tpu.pipeline_mode<synchronous>, transform_indices = @transform_2, window_bounds = array<i64: 4, 8, 32>}, {pipeline_mode = #tpu.pipeline_mode<synchronous>, transform_indices = @transform_3, window_bounds = array<i64: 32, 64>}, {pipeline_mode = #tpu.pipeline_mode<synchronous>, transform_indices = @transform_4, window_bounds = array<i64: 1, 64>}, {pipeline_mode = #tpu.pipeline_mode<synchronous>, transform_indices = @transform_5, window_bounds = array<i64: 64, 32>}, {pipeline_mode = #tpu.pipeline_mode<synchronous>, transform_indices = @transform_6, window_bounds = array<i64: 1, 32>}, {pipeline_mode = #tpu.pipeline_mode<synchronous>, transform_indices = @transform_7, window_bounds = array<i64: 1, 32>}, {pipeline_mode = #tpu.pipeline_mode<synchronous>, transform_indices = @transform_8, window_bounds = array<i64: 1, 32>}, {transform_indices = @transform_9, window_bounds = array<i64: 2, 8, 32>}]} {
    %c0 = arith.constant 0 : index
    %c0_0 = arith.constant 0 : index
    %c0_1 = arith.constant 0 : index
    %0 = vector.load %arg1[%c0, %c0_0, %c0_1] : memref<2x8x32xf32, #tpu.memory_space<vmem>>, vector<2x8x32xf32>
    %1 = vector.shape_cast %0 : vector<2x8x32xf32> to vector<16x32xf32>
    %2 = arith.truncf %1 : vector<16x32xf32> to vector<16x32xbf16>
    %cst = arith.constant 0.000000e+00 : f32
    %3 = vector.broadcast %cst : f32 to vector<16x32xf32>
    %c0_2 = arith.constant 0 : index
    %c0_3 = arith.constant 0 : index
    %c0_4 = arith.constant 0 : index
    %4 = vector.load %arg2[%c0_2, %c0_3, %c0_4] : memref<4x32x24xbf16, #tpu.memory_space<vmem>>, vector<1x32x24xbf16>
    %5 = vector.shape_cast %4 : vector<1x32x24xbf16> to vector<32x24xbf16>
    %cst_5 = arith.constant dense<0.000000e+00> : vector<16x24xf32>
    %6 = tpu.matmul %2, %5, %cst_5 {dimension_numbers = #tpu.dot_dimension_numbers<[1], [0], [0], [1], [0, 0, 1, 1], [], []>} : vector<16x32xbf16>, vector<32x24xbf16>, vector<16x24xf32> -> vector<16x24xf32>
    %7 = vector.extract_strided_slice %6 {offsets = [0, 0], sizes = [16, 8], strides = [1, 1]} : vector<16x24xf32> to vector<16x8xf32>
    %8 = arith.truncf %7 : vector<16x8xf32> to vector<16x8xbf16>
    %9 = vector.shape_cast %8 : vector<16x8xbf16> to vector<2x8x8xbf16>
    %10 = vector.extract_strided_slice %6 {offsets = [0, 8], sizes = [16, 8], strides = [1, 1]} : vector<16x24xf32> to vector<16x8xf32>
    %11 = arith.truncf %10 : vector<16x8xf32> to vector<16x8xbf16>
    %12 = vector.shape_cast %11 : vector<16x8xbf16> to vector<2x8x8xbf16>
    %13 = vector.extract_strided_slice %6 {offsets = [0, 16], sizes = [16, 8], strides = [1, 1]} : vector<16x24xf32> to vector<16x8xf32>
    %14 = arith.truncf %13 : vector<16x8xf32> to vector<16x8xbf16>
    %15 = vector.shape_cast %14 : vector<16x8xbf16> to vector<2x8x8xbf16>
    "tpu.trace_start"() <{level = 10 : i32, message = "bid,bjd->bij"}> : () -> ()
    %cst_6 = arith.constant dense<0.000000e+00> : vector<2x8x8xf32>
    %16 = tpu.matmul %9, %12, %cst_6 {dimension_numbers = #tpu.dot_dimension_numbers<[2], [2], [1], [1], [0, 0, 0, 1, 1, 1], [0], [0]>} : vector<2x8x8xbf16>, vector<2x8x8xbf16>, vector<2x8x8xf32> -> vector<2x8x8xf32>
    "tpu.trace_stop"() : () -> ()
    %cst_7 = arith.constant dense<0xFF800000> : vector<2x8xf32>
    %17 = vector.multi_reduction <maximumf>, %16, %cst_7 [2] : vector<2x8x8xf32> to vector<2x8xf32>
    %18 = vector.shape_cast %17 : vector<2x8xf32> to vector<2x8x1xf32>
    %19 = vector.broadcast %18 : vector<2x8x1xf32> to vector<2x8x8xf32>
    %20 = arith.subf %16, %19 : vector<2x8x8xf32>
    %21 = math.exp %20 : vector<2x8x8xf32>
    %cst_8 = arith.constant dense<0.000000e+00> : vector<2x8xf32>
    %22 = vector.multi_reduction <add>, %21, %cst_8 [2] : vector<2x8x8xf32> to vector<2x8xf32>
    %23 = vector.shape_cast %22 : vector<2x8xf32> to vector<2x8x1xf32>
    %24 = tpu.reciprocal %23 {approx = true} : vector<2x8x1xf32> -> vector<2x8x1xf32>
    %25 = vector.broadcast %24 : vector<2x8x1xf32> to vector<2x8x8xf32>
    %26 = arith.mulf %21, %25 : vector<2x8x8xf32>
    %27 = arith.truncf %26 : vector<2x8x8xf32> to vector<2x8x8xbf16>
    "tpu.trace_start"() <{level = 10 : i32, message = "bij,bjd->bid"}> : () -> ()
    %cst_9 = arith.constant dense<0.000000e+00> : vector<2x8x8xf32>
    %28 = tpu.matmul %27, %15, %cst_9 {dimension_numbers = #tpu.dot_dimension_numbers<[2], [1], [1], [2], [0, 0, 0, 1, 1, 2], [0], [0]>} : vector<2x8x8xbf16>, vector<2x8x8xbf16>, vector<2x8x8xf32> -> vector<2x8x8xf32>
    "tpu.trace_stop"() : () -> ()
    %29 = vector.shape_cast %28 : vector<2x8x8xf32> to vector<16x8xf32>
    %30 = arith.truncf %29 : vector<16x8xf32> to vector<16x8xbf16>
    %c0_10 = arith.constant 0 : index
    %c0_11 = arith.constant 0 : index
    %c0_12 = arith.constant 0 : index
    %31 = vector.load %arg3[%c0_10, %c0_11, %c0_12] : memref<4x8x32xbf16, #tpu.memory_space<vmem>>, vector<1x8x32xbf16>
    %32 = vector.shape_cast %31 : vector<1x8x32xbf16> to vector<8x32xbf16>
    %cst_13 = arith.constant dense<0.000000e+00> : vector<16x32xf32>
    %33 = tpu.matmul %30, %32, %cst_13 {dimension_numbers = #tpu.dot_dimension_numbers<[1], [0], [0], [1], [0, 0, 1, 1], [], []>} : vector<16x8xbf16>, vector<8x32xbf16>, vector<16x32xf32> -> vector<16x32xf32>
    %34 = arith.addf %3, %33 : vector<16x32xf32>
    %c1 = arith.constant 1 : index
    %c0_14 = arith.constant 0 : index
    %c0_15 = arith.constant 0 : index
    %35 = vector.load %arg2[%c1, %c0_14, %c0_15] : memref<4x32x24xbf16, #tpu.memory_space<vmem>>, vector<1x32x24xbf16>
    %36 = vector.shape_cast %35 : vector<1x32x24xbf16> to vector<32x24xbf16>
    %cst_16 = arith.constant dense<0.000000e+00> : vector<16x24xf32>
    %37 = tpu.matmul %2, %36, %cst_16 {dimension_numbers = #tpu.dot_dimension_numbers<[1], [0], [0], [1], [0, 0, 1, 1], [], []>} : vector<16x32xbf16>, vector<32x24xbf16>, vector<16x24xf32> -> vector<16x24xf32>
    %38 = vector.extract_strided_slice %37 {offsets = [0, 0], sizes = [16, 8], strides = [1, 1]} : vector<16x24xf32> to vector<16x8xf32>
    %39 = arith.truncf %38 : vector<16x8xf32> to vector<16x8xbf16>
    %40 = vector.shape_cast %39 : vector<16x8xbf16> to vector<2x8x8xbf16>
    %41 = vector.extract_strided_slice %37 {offsets = [0, 8], sizes = [16, 8], strides = [1, 1]} : vector<16x24xf32> to vector<16x8xf32>
    %42 = arith.truncf %41 : vector<16x8xf32> to vector<16x8xbf16>
    %43 = vector.shape_cast %42 : vector<16x8xbf16> to vector<2x8x8xbf16>
    %44 = vector.extract_strided_slice %37 {offsets = [0, 16], sizes = [16, 8], strides = [1, 1]} : vector<16x24xf32> to vector<16x8xf32>
    %45 = arith.truncf %44 : vector<16x8xf32> to vector<16x8xbf16>
    %46 = vector.shape_cast %45 : vector<16x8xbf16> to vector<2x8x8xbf16>
    "tpu.trace_start"() <{level = 10 : i32, message = "bid,bjd->bij"}> : () -> ()
    %cst_17 = arith.constant dense<0.000000e+00> : vector<2x8x8xf32>
    %47 = tpu.matmul %40, %43, %cst_17 {dimension_numbers = #tpu.dot_dimension_numbers<[2], [2], [1], [1], [0, 0, 0, 1, 1, 1], [0], [0]>} : vector<2x8x8xbf16>, vector<2x8x8xbf16>, vector<2x8x8xf32> -> vector<2x8x8xf32>
    "tpu.trace_stop"() : () -> ()
    %cst_18 = arith.constant dense<0xFF800000> : vector<2x8xf32>
    %48 = vector.multi_reduction <maximumf>, %47, %cst_18 [2] : vector<2x8x8xf32> to vector<2x8xf32>
    %49 = vector.shape_cast %48 : vector<2x8xf32> to vector<2x8x1xf32>
    %50 = vector.broadcast %49 : vector<2x8x1xf32> to vector<2x8x8xf32>
    %51 = arith.subf %47, %50 : vector<2x8x8xf32>
    %52 = math.exp %51 : vector<2x8x8xf32>
    %cst_19 = arith.constant dense<0.000000e+00> : vector<2x8xf32>
    %53 = vector.multi_reduction <add>, %52, %cst_19 [2] : vector<2x8x8xf32> to vector<2x8xf32>
    %54 = vector.shape_cast %53 : vector<2x8xf32> to vector<2x8x1xf32>
    %55 = tpu.reciprocal %54 {approx = true} : vector<2x8x1xf32> -> vector<2x8x1xf32>
    %56 = vector.broadcast %55 : vector<2x8x1xf32> to vector<2x8x8xf32>
    %57 = arith.mulf %52, %56 : vector<2x8x8xf32>
    %58 = arith.truncf %57 : vector<2x8x8xf32> to vector<2x8x8xbf16>
    "tpu.trace_start"() <{level = 10 : i32, message = "bij,bjd->bid"}> : () -> ()
    %cst_20 = arith.constant dense<0.000000e+00> : vector<2x8x8xf32>
    %59 = tpu.matmul %58, %46, %cst_20 {dimension_numbers = #tpu.dot_dimension_numbers<[2], [1], [1], [2], [0, 0, 0, 1, 1, 2], [0], [0]>} : vector<2x8x8xbf16>, vector<2x8x8xbf16>, vector<2x8x8xf32> -> vector<2x8x8xf32>
    "tpu.trace_stop"() : () -> ()
    %60 = vector.shape_cast %59 : vector<2x8x8xf32> to vector<16x8xf32>
    %61 = arith.truncf %60 : vector<16x8xf32> to vector<16x8xbf16>
    %c1_21 = arith.constant 1 : index
    %c0_22 = arith.constant 0 : index
    %c0_23 = arith.constant 0 : index
    %62 = vector.load %arg3[%c1_21, %c0_22, %c0_23] : memref<4x8x32xbf16, #tpu.memory_space<vmem>>, vector<1x8x32xbf16>
    %63 = vector.shape_cast %62 : vector<1x8x32xbf16> to vector<8x32xbf16>
    %cst_24 = arith.constant dense<0.000000e+00> : vector<16x32xf32>
    %64 = tpu.matmul %61, %63, %cst_24 {dimension_numbers = #tpu.dot_dimension_numbers<[1], [0], [0], [1], [0, 0, 1, 1], [], []>} : vector<16x8xbf16>, vector<8x32xbf16>, vector<16x32xf32> -> vector<16x32xf32>
    %65 = arith.addf %34, %64 : vector<16x32xf32>
    %c2 = arith.constant 2 : index
    %c0_25 = arith.constant 0 : index
    %c0_26 = arith.constant 0 : index
    %66 = vector.load %arg2[%c2, %c0_25, %c0_26] : memref<4x32x24xbf16, #tpu.memory_space<vmem>>, vector<1x32x24xbf16>
    %67 = vector.shape_cast %66 : vector<1x32x24xbf16> to vector<32x24xbf16>
    %cst_27 = arith.constant dense<0.000000e+00> : vector<16x24xf32>
    %68 = tpu.matmul %2, %67, %cst_27 {dimension_numbers = #tpu.dot_dimension_numbers<[1], [0], [0], [1], [0, 0, 1, 1], [], []>} : vector<16x32xbf16>, vector<32x24xbf16>, vector<16x24xf32> -> vector<16x24xf32>
    %69 = vector.extract_strided_slice %68 {offsets = [0, 0], sizes = [16, 8], strides = [1, 1]} : vector<16x24xf32> to vector<16x8xf32>
    %70 = arith.truncf %69 : vector<16x8xf32> to vector<16x8xbf16>
    %71 = vector.shape_cast %70 : vector<16x8xbf16> to vector<2x8x8xbf16>
    %72 = vector.extract_strided_slice %68 {offsets = [0, 8], sizes = [16, 8], strides = [1, 1]} : vector<16x24xf32> to vector<16x8xf32>
    %73 = arith.truncf %72 : vector<16x8xf32> to vector<16x8xbf16>
    %74 = vector.shape_cast %73 : vector<16x8xbf16> to vector<2x8x8xbf16>
    %75 = vector.extract_strided_slice %68 {offsets = [0, 16], sizes = [16, 8], strides = [1, 1]} : vector<16x24xf32> to vector<16x8xf32>
    %76 = arith.truncf %75 : vector<16x8xf32> to vector<16x8xbf16>
    %77 = vector.shape_cast %76 : vector<16x8xbf16> to vector<2x8x8xbf16>
    "tpu.trace_start"() <{level = 10 : i32, message = "bid,bjd->bij"}> : () -> ()
    %cst_28 = arith.constant dense<0.000000e+00> : vector<2x8x8xf32>
    %78 = tpu.matmul %71, %74, %cst_28 {dimension_numbers = #tpu.dot_dimension_numbers<[2], [2], [1], [1], [0, 0, 0, 1, 1, 1], [0], [0]>} : vector<2x8x8xbf16>, vector<2x8x8xbf16>, vector<2x8x8xf32> -> vector<2x8x8xf32>
    "tpu.trace_stop"() : () -> ()
    %cst_29 = arith.constant dense<0xFF800000> : vector<2x8xf32>
    %79 = vector.multi_reduction <maximumf>, %78, %cst_29 [2] : vector<2x8x8xf32> to vector<2x8xf32>
    %80 = vector.shape_cast %79 : vector<2x8xf32> to vector<2x8x1xf32>
    %81 = vector.broadcast %80 : vector<2x8x1xf32> to vector<2x8x8xf32>
    %82 = arith.subf %78, %81 : vector<2x8x8xf32>
    %83 = math.exp %82 : vector<2x8x8xf32>
    %cst_30 = arith.constant dense<0.000000e+00> : vector<2x8xf32>
    %84 = vector.multi_reduction <add>, %83, %cst_30 [2] : vector<2x8x8xf32> to vector<2x8xf32>
    %85 = vector.shape_cast %84 : vector<2x8xf32> to vector<2x8x1xf32>
    %86 = tpu.reciprocal %85 {approx = true} : vector<2x8x1xf32> -> vector<2x8x1xf32>
    %87 = vector.broadcast %86 : vector<2x8x1xf32> to vector<2x8x8xf32>
    %88 = arith.mulf %83, %87 : vector<2x8x8xf32>
    %89 = arith.truncf %88 : vector<2x8x8xf32> to vector<2x8x8xbf16>
    "tpu.trace_start"() <{level = 10 : i32, message = "bij,bjd->bid"}> : () -> ()
    %cst_31 = arith.constant dense<0.000000e+00> : vector<2x8x8xf32>
    %90 = tpu.matmul %89, %77, %cst_31 {dimension_numbers = #tpu.dot_dimension_numbers<[2], [1], [1], [2], [0, 0, 0, 1, 1, 2], [0], [0]>} : vector<2x8x8xbf16>, vector<2x8x8xbf16>, vector<2x8x8xf32> -> vector<2x8x8xf32>
    "tpu.trace_stop"() : () -> ()
    %91 = vector.shape_cast %90 : vector<2x8x8xf32> to vector<16x8xf32>
    %92 = arith.truncf %91 : vector<16x8xf32> to vector<16x8xbf16>
    %c2_32 = arith.constant 2 : index
    %c0_33 = arith.constant 0 : index
    %c0_34 = arith.constant 0 : index
    %93 = vector.load %arg3[%c2_32, %c0_33, %c0_34] : memref<4x8x32xbf16, #tpu.memory_space<vmem>>, vector<1x8x32xbf16>
    %94 = vector.shape_cast %93 : vector<1x8x32xbf16> to vector<8x32xbf16>
    %cst_35 = arith.constant dense<0.000000e+00> : vector<16x32xf32>
    %95 = tpu.matmul %92, %94, %cst_35 {dimension_numbers = #tpu.dot_dimension_numbers<[1], [0], [0], [1], [0, 0, 1, 1], [], []>} : vector<16x8xbf16>, vector<8x32xbf16>, vector<16x32xf32> -> vector<16x32xf32>
    %96 = arith.addf %65, %95 : vector<16x32xf32>
    %c3 = arith.constant 3 : index
    %c0_36 = arith.constant 0 : index
    %c0_37 = arith.constant 0 : index
    %97 = vector.load %arg2[%c3, %c0_36, %c0_37] : memref<4x32x24xbf16, #tpu.memory_space<vmem>>, vector<1x32x24xbf16>
    %98 = vector.shape_cast %97 : vector<1x32x24xbf16> to vector<32x24xbf16>
    %cst_38 = arith.constant dense<0.000000e+00> : vector<16x24xf32>
    %99 = tpu.matmul %2, %98, %cst_38 {dimension_numbers = #tpu.dot_dimension_numbers<[1], [0], [0], [1], [0, 0, 1, 1], [], []>} : vector<16x32xbf16>, vector<32x24xbf16>, vector<16x24xf32> -> vector<16x24xf32>
    %100 = vector.extract_strided_slice %99 {offsets = [0, 0], sizes = [16, 8], strides = [1, 1]} : vector<16x24xf32> to vector<16x8xf32>
    %101 = arith.truncf %100 : vector<16x8xf32> to vector<16x8xbf16>
    %102 = vector.shape_cast %101 : vector<16x8xbf16> to vector<2x8x8xbf16>
    %103 = vector.extract_strided_slice %99 {offsets = [0, 8], sizes = [16, 8], strides = [1, 1]} : vector<16x24xf32> to vector<16x8xf32>
    %104 = arith.truncf %103 : vector<16x8xf32> to vector<16x8xbf16>
    %105 = vector.shape_cast %104 : vector<16x8xbf16> to vector<2x8x8xbf16>
    %106 = vector.extract_strided_slice %99 {offsets = [0, 16], sizes = [16, 8], strides = [1, 1]} : vector<16x24xf32> to vector<16x8xf32>
    %107 = arith.truncf %106 : vector<16x8xf32> to vector<16x8xbf16>
    %108 = vector.shape_cast %107 : vector<16x8xbf16> to vector<2x8x8xbf16>
    "tpu.trace_start"() <{level = 10 : i32, message = "bid,bjd->bij"}> : () -> ()
    %cst_39 = arith.constant dense<0.000000e+00> : vector<2x8x8xf32>
    %109 = tpu.matmul %102, %105, %cst_39 {dimension_numbers = #tpu.dot_dimension_numbers<[2], [2], [1], [1], [0, 0, 0, 1, 1, 1], [0], [0]>} : vector<2x8x8xbf16>, vector<2x8x8xbf16>, vector<2x8x8xf32> -> vector<2x8x8xf32>
    "tpu.trace_stop"() : () -> ()
    %cst_40 = arith.constant dense<0xFF800000> : vector<2x8xf32>
    %110 = vector.multi_reduction <maximumf>, %109, %cst_40 [2] : vector<2x8x8xf32> to vector<2x8xf32>
    %111 = vector.shape_cast %110 : vector<2x8xf32> to vector<2x8x1xf32>
    %112 = vector.broadcast %111 : vector<2x8x1xf32> to vector<2x8x8xf32>
    %113 = arith.subf %109, %112 : vector<2x8x8xf32>
    %114 = math.exp %113 : vector<2x8x8xf32>
    %cst_41 = arith.constant dense<0.000000e+00> : vector<2x8xf32>
    %115 = vector.multi_reduction <add>, %114, %cst_41 [2] : vector<2x8x8xf32> to vector<2x8xf32>
    %116 = vector.shape_cast %115 : vector<2x8xf32> to vector<2x8x1xf32>
    %117 = tpu.reciprocal %116 {approx = true} : vector<2x8x1xf32> -> vector<2x8x1xf32>
    %118 = vector.broadcast %117 : vector<2x8x1xf32> to vector<2x8x8xf32>
    %119 = arith.mulf %114, %118 : vector<2x8x8xf32>
    %120 = arith.truncf %119 : vector<2x8x8xf32> to vector<2x8x8xbf16>
    "tpu.trace_start"() <{level = 10 : i32, message = "bij,bjd->bid"}> : () -> ()
    %cst_42 = arith.constant dense<0.000000e+00> : vector<2x8x8xf32>
    %121 = tpu.matmul %120, %108, %cst_42 {dimension_numbers = #tpu.dot_dimension_numbers<[2], [1], [1], [2], [0, 0, 0, 1, 1, 2], [0], [0]>} : vector<2x8x8xbf16>, vector<2x8x8xbf16>, vector<2x8x8xf32> -> vector<2x8x8xf32>
    "tpu.trace_stop"() : () -> ()
    %122 = vector.shape_cast %121 : vector<2x8x8xf32> to vector<16x8xf32>
    %123 = arith.truncf %122 : vector<16x8xf32> to vector<16x8xbf16>
    %c3_43 = arith.constant 3 : index
    %c0_44 = arith.constant 0 : index
    %c0_45 = arith.constant 0 : index
    %124 = vector.load %arg3[%c3_43, %c0_44, %c0_45] : memref<4x8x32xbf16, #tpu.memory_space<vmem>>, vector<1x8x32xbf16>
    %125 = vector.shape_cast %124 : vector<1x8x32xbf16> to vector<8x32xbf16>
    %cst_46 = arith.constant dense<0.000000e+00> : vector<16x32xf32>
    %126 = tpu.matmul %123, %125, %cst_46 {dimension_numbers = #tpu.dot_dimension_numbers<[1], [0], [0], [1], [0, 0, 1, 1], [], []>} : vector<16x8xbf16>, vector<8x32xbf16>, vector<16x32xf32> -> vector<16x32xf32>
    %127 = arith.addf %96, %126 : vector<16x32xf32>
    %c0_47 = arith.constant 0 : index
    %c0_48 = arith.constant 0 : index
    %128 = vector.load %arg4[%c0_47, %c0_48] : memref<32x64xbf16, #tpu.memory_space<vmem>>, vector<32x64xbf16>
    %cst_49 = arith.constant dense<0.000000e+00> : vector<16x64xf32>
    %129 = tpu.matmul %2, %128, %cst_49 {dimension_numbers = #tpu.dot_dimension_numbers<[1], [0], [0], [1], [0, 0, 1, 1], [], []>} : vector<16x32xbf16>, vector<32x64xbf16>, vector<16x64xf32> -> vector<16x64xf32>
    %c0_50 = arith.constant 0 : index
    %c0_51 = arith.constant 0 : index
    %130 = vector.load %arg5[%c0_50, %c0_51] : memref<1x64xf32, #tpu.memory_space<vmem>>, vector<1x64xf32>
    %131 = vector.broadcast %130 : vector<1x64xf32> to vector<16x64xf32>
    %132 = arith.addf %129, %131 : vector<16x64xf32>
    %cst_52 = arith.constant 5.000000e-01 : f32
    %133 = vector.broadcast %cst_52 : f32 to vector<16x64xf32>
    %134 = arith.mulf %133, %132 : vector<16x64xf32>
    %cst_53 = arith.constant 0.707106769 : f32
    %135 = vector.broadcast %cst_53 : f32 to vector<16x64xf32>
    %136 = arith.mulf %132, %135 : vector<16x64xf32>
    %137 = math.erf %136 : vector<16x64xf32>
    %cst_54 = arith.constant 1.000000e+00 : f32
    %138 = vector.broadcast %cst_54 : f32 to vector<16x64xf32>
    %139 = arith.addf %138, %137 : vector<16x64xf32>
    %140 = arith.mulf %134, %139 : vector<16x64xf32>
    %141 = arith.truncf %140 : vector<16x64xf32> to vector<16x64xbf16>
    %c0_55 = arith.constant 0 : index
    %c0_56 = arith.constant 0 : index
    %142 = vector.load %arg6[%c0_55, %c0_56] : memref<64x32xbf16, #tpu.memory_space<vmem>>, vector<64x32xbf16>
    %cst_57 = arith.constant dense<0.000000e+00> : vector<16x32xf32>
    %143 = tpu.matmul %141, %142, %cst_57 {dimension_numbers = #tpu.dot_dimension_numbers<[1], [0], [0], [1], [0, 0, 1, 1], [], []>} : vector<16x64xbf16>, vector<64x32xbf16>, vector<16x32xf32> -> vector<16x32xf32>
    %144 = arith.addf %127, %143 : vector<16x32xf32>
    %c0_58 = arith.constant 0 : index
    %c0_59 = arith.constant 0 : index
    %145 = vector.load %arg7[%c0_58, %c0_59] : memref<1x32xf32, #tpu.memory_space<vmem>>, vector<1x32xf32>
    %146 = vector.broadcast %145 : vector<1x32xf32> to vector<16x32xf32>
    %147 = arith.addf %144, %146 : vector<16x32xf32>
    %148 = arith.addf %1, %147 : vector<16x32xf32>
    %cst_60 = arith.constant dense<0.000000e+00> : vector<16xf32>
    %149 = vector.multi_reduction <add>, %148, %cst_60 [1] : vector<16x32xf32> to vector<16xf32>
    %150 = vector.shape_cast %149 : vector<16xf32> to vector<16x1xf32>
    %cst_61 = arith.constant 3.200000e+01 : f32
    %151 = vector.broadcast %cst_61 : f32 to vector<16x1xf32>
    %152 = arith.divf %150, %151 : vector<16x1xf32>
    %153 = vector.broadcast %152 : vector<16x1xf32> to vector<16x32xf32>
    %154 = arith.subf %148, %153 : vector<16x32xf32>
    %155 = arith.mulf %154, %154 : vector<16x32xf32>
    %cst_62 = arith.constant dense<0.000000e+00> : vector<16xf32>
    %156 = vector.multi_reduction <add>, %155, %cst_62 [1] : vector<16x32xf32> to vector<16xf32>
    %157 = vector.shape_cast %156 : vector<16xf32> to vector<16x1xf32>
    %cst_63 = arith.constant 3.200000e+01 : f32
    %158 = vector.broadcast %cst_63 : f32 to vector<16x1xf32>
    %159 = arith.divf %157, %158 : vector<16x1xf32>
    %160 = vector.broadcast %152 : vector<16x1xf32> to vector<16x32xf32>
    %161 = arith.subf %148, %160 : vector<16x32xf32>
    %cst_64 = arith.constant 9.99999974E-6 : f32
    %162 = vector.broadcast %cst_64 : f32 to vector<16x1xf32>
    %163 = arith.addf %159, %162 : vector<16x1xf32>
    %164 = math.rsqrt %163 : vector<16x1xf32>
    %165 = vector.broadcast %164 : vector<16x1xf32> to vector<16x32xf32>
    %166 = arith.mulf %161, %165 : vector<16x32xf32>
    %c0_65 = arith.constant 0 : index
    %c0_66 = arith.constant 0 : index
    %167 = vector.load %arg8[%c0_65, %c0_66] : memref<1x32xf32, #tpu.memory_space<vmem>>, vector<1x32xf32>
    %168 = vector.broadcast %167 : vector<1x32xf32> to vector<16x32xf32>
    %169 = arith.mulf %166, %168 : vector<16x32xf32>
    %c0_67 = arith.constant 0 : index
    %c0_68 = arith.constant 0 : index
    %170 = vector.load %arg9[%c0_67, %c0_68] : memref<1x32xf32, #tpu.memory_space<vmem>>, vector<1x32xf32>
    %171 = vector.broadcast %170 : vector<1x32xf32> to vector<16x32xf32>
    %172 = arith.addf %169, %171 : vector<16x32xf32>
    %173 = vector.shape_cast %172 : vector<16x32xf32> to vector<2x8x32xf32>
    %c0_69 = arith.constant 0 : index
    %c0_70 = arith.constant 0 : index
    %c0_71 = arith.constant 0 : index
    %174 = vector.load %arg10[%c0_69, %c0_70, %c0_71] : memref<2x8x32xf32, #tpu.memory_space<vmem>>, vector<2x8x32xf32>
    tpu.vector_store %arg10[%c0_69, %c0_70, %c0_71], %173 {strides = array<i32>} : memref<2x8x32xf32, #tpu.memory_space<vmem>>, vector<2x8x32xf32>,
    return
  }
  func.func @transform_0(%arg0: i32) -> (i32, i32, i32) {
    %c0_i32 = arith.constant 0 : i32
    %c0_i32_0 = arith.constant 0 : i32
    %c0_i32_1 = arith.constant 0 : i32
    return %arg0, %c0_i32, %c0_i32_0 : i32, i32, i32
  }
  func.func @transform_1(%arg0: i32) -> (i32, i32, i32) {
    %c0_i32 = arith.constant 0 : i32
    %c0_i32_0 = arith.constant 0 : i32
    %c0_i32_1 = arith.constant 0 : i32
    %c0_i32_2 = arith.constant 0 : i32
    return %c0_i32, %c0_i32_0, %c0_i32_1 : i32, i32, i32
  }
  func.func @transform_2(%arg0: i32) -> (i32, i32, i32) {
    %c0_i32 = arith.constant 0 : i32
    %c0_i32_0 = arith.constant 0 : i32
    %c0_i32_1 = arith.constant 0 : i32
    %c0_i32_2 = arith.constant 0 : i32
    return %c0_i32, %c0_i32_0, %c0_i32_1 : i32, i32, i32
  }
  func.func @transform_3(%arg0: i32) -> (i32, i32) {
    %c0_i32 = arith.constant 0 : i32
    %c0_i32_0 = arith.constant 0 : i32
    %c0_i32_1 = arith.constant 0 : i32
    return %c0_i32, %c0_i32_0 : i32, i32
  }
  func.func @transform_4(%arg0: i32) -> (i32, i32) {
    %c0_i32 = arith.constant 0 : i32
    %c0_i32_0 = arith.constant 0 : i32
    %c0_i32_1 = arith.constant 0 : i32
    return %c0_i32, %c0_i32_0 : i32, i32
  }
  func.func @transform_5(%arg0: i32) -> (i32, i32) {
    %c0_i32 = arith.constant 0 : i32
    %c0_i32_0 = arith.constant 0 : i32
    %c0_i32_1 = arith.constant 0 : i32
    return %c0_i32, %c0_i32_0 : i32, i32
  }
  func.func @transform_6(%arg0: i32) -> (i32, i32) {
    %c0_i32 = arith.constant 0 : i32
    %c0_i32_0 = arith.constant 0 : i32
    %c0_i32_1 = arith.constant 0 : i32
    return %c0_i32, %c0_i32_0 : i32, i32
  }
  func.func @transform_7(%arg0: i32) -> (i32, i32) {
    %c0_i32 = arith.constant 0 : i32
    %c0_i32_0 = arith.constant 0 : i32
    %c0_i32_1 = arith.constant 0 : i32
    return %c0_i32, %c0_i32_0 : i32, i32
  }
  func.func @transform_8(%arg0: i32) -> (i32, i32) {
    %c0_i32 = arith.constant 0 : i32
    %c0_i32_0 = arith.constant 0 : i32
    %c0_i32_1 = arith.constant 0 : i32
    return %c0_i32, %c0_i32_0 : i32, i32
  }
  func.func @transform_9(%arg0: i32) -> (i32, i32, i32) {
    %c0_i32 = arith.constant 0 : i32
    %c0_i32_0 = arith.constant 0 : i32
    %c0_i32_1 = arith.constant 0 : i32
    return %arg0, %c0_i32, %c0_i32_0 : i32, i32, i32
  }
}

</mosaic_0001>

<llo_original>
// kernel: _lambda_.1
$region0: #{_lambda_.1}
  #allocation0 [shape = 'u32[]', space=smem, size = 0x4, offset = 0x4, fixed_abs, tag = 'smem constant byte address 0x4 - core index']
  #allocation1 [shape = 'u32[144,128]{1,0:T(1,128)}', space=vmem, size = 0x12000, scoped, tag = 'internal scratch']
  %s0 = inlined_call_operand.vmem [shape: f32[2,8,32], index: 0, kind: input, shape index: {}]
  %s1 = inlined_call_operand.vmem [shape: bf16[4,32,24], index: 1, kind: input, shape index: {}]
  %s2 = inlined_call_operand.vmem [shape: bf16[4,8,32], index: 2, kind: input, shape index: {}]
  %s3 = inlined_call_operand.vmem [shape: bf16[32,64], index: 3, kind: input, shape index: {}]
  %s4 = inlined_call_operand.vmem [shape: f32[1,64], index: 4, kind: input, shape index: {}]
  %s5 = inlined_call_operand.vmem [shape: bf16[64,32], index: 5, kind: input, shape index: {}]
  %s6 = inlined_call_operand.vmem [shape: f32[1,32], index: 6, kind: input, shape index: {}]
  %s7 = inlined_call_operand.vmem [shape: f32[1,32], index: 7, kind: input, shape index: {}]
  %s8 = inlined_call_operand.vmem [shape: f32[1,32], index: 8, kind: input, shape index: {}]
  %s9 = inlined_call_operand.hbm [shape: f32[2,8,32], index: 9, kind: output, shape index: {}]
  %s10 = sld [smem:[#allocation0]]
  $region46: #{_lambda_.1} parent=0
    _
  %s12 = ssub.s32 1, %s10
  %s13 = scalar_select 0, %s12, %s10
  $region1: #{_lambda_.1} parent=0
    #allocation2 [shape = 'u8[8192]{0}', space=vmem, size = 0x2000, scoped, tag = 'output window, operand 0, single buffered']
    #allocation3 [shape = 's32[1]{0}', space=sflag, size = 0x4, scoped, tag = 'scoped memory for _lambda_.1']
    %14 = vsyncpa [#allocation3], 0
    // Predicated region
    $region2: #{_lambda_.1} parent=1 // pred_check
      _
    $region3: #{_lambda_.1} parent=1 // pred_check_branch
      %16 = sbr.rel (0) target = $region5
    $region4: #{_lambda_.1} parent=1 // pred_region
      _
    $region5: #{_lambda_.1} parent=1 // pred_fallthru
      _
    // Predicated region
    $region6: #{_lambda_.1} parent=1 // pred_check
      _
    $region7: #{_lambda_.1} parent=1 // pred_check_branch
      %18 = sbr.rel (0) target = $region9
    $region8: #{_lambda_.1} parent=1 // pred_region
      _
    $region9: #{_lambda_.1} parent=1 // pred_fallthru
      _
    // Predicated region
    $region10: #{_lambda_.1} parent=1 // pred_check
      _
    $region11: #{_lambda_.1} parent=1 // pred_check_branch
      %20 = sbr.rel (0) target = $region13
    $region12: #{_lambda_.1} parent=1 // pred_region
      _
    $region13: #{_lambda_.1} parent=1 // pred_fallthru
      _
    // Predicated region
    $region14: #{_lambda_.1} parent=1 // pred_check
      _
    $region15: #{_lambda_.1} parent=1 // pred_check_branch
      %22 = sbr.rel (0) target = $region17
    $region16: #{_lambda_.1} parent=1 // pred_region
      _
    $region17: #{_lambda_.1} parent=1 // pred_fallthru
      _
    // Predicated region
    $region18: #{_lambda_.1} parent=1 // pred_check
      _
    $region19: #{_lambda_.1} parent=1 // pred_check_branch
      %24 = sbr.rel (0) target = $region21
    $region20: #{_lambda_.1} parent=1 // pred_region
      _
    $region21: #{_lambda_.1} parent=1 // pred_fallthru
      _
    // Predicated region
    $region22: #{_lambda_.1} parent=1 // pred_check
      _
    $region23: #{_lambda_.1} parent=1 // pred_check_branch
      %26 = sbr.rel (0) target = $region25
    $region24: #{_lambda_.1} parent=1 // pred_region
      _
    $region25: #{_lambda_.1} parent=1 // pred_fallthru
      _
    // Predicated region
    $region26: #{_lambda_.1} parent=1 // pred_check
      _
    $region27: #{_lambda_.1} parent=1 // pred_check_branch
      %28 = sbr.rel (0) target = $region29
    $region28: #{_lambda_.1} parent=1 // pred_region
      _
    $region29: #{_lambda_.1} parent=1 // pred_fallthru
      _
    // Predicated region
    $region30: #{_lambda_.1} parent=1 // pred_check
      _
    $region31: #{_lambda_.1} parent=1 // pred_check_branch
      %30 = sbr.rel (0) target = $region33
    $region32: #{_lambda_.1} parent=1 // pred_region
      _
    $region33: #{_lambda_.1} parent=1 // pred_fallthru
      _
    // Predicated region
    $region34: #{_lambda_.1} parent=1 // pred_check
      _
    $region35: #{_lambda_.1} parent=1 // pred_check_branch
      %32 = sbr.rel (0) target = $region37
    $region36: #{_lambda_.1} parent=1 // pred_region
      _
    $region37: #{_lambda_.1} parent=1 // pred_fallthru
      _
    %v34 = vld [vmem:[%s0] sm:$0xff]
    %v35 = vld [vmem:[%s0 + $0x8] sm:$0xff]
    %v36 = vpack.c.bf16 %v35, %v34
    %v37 = vld [vmem:[%s1] sm:$0xf]
    %v38 = vld [vmem:[%s1 + $0x4] sm:$0xf]
    %v39 = vld [vmem:[%s1 + $0x8] sm:$0xf]
    %v40 = vld [vmem:[%s1 + $0xc] sm:$0xf]
    %v45 = vunpack.c.l.b16 %v37
    %v46 = vunpack.c.l.b16 %v38
    %v47 = vunpack.c.l.b16 %v39
    %v48 = vunpack.c.l.b16 %v40
    %v49 = vpack.c.b16 %v46, %v45
    %v50 = vpack.c.b16 %v48, %v47
    %vm53 = vcmask 261120
    %v55 = vsel %vm53, %v36, 0
    %57 = vmatprep.subr.bf16.mxu0 0
    %58 = vmatpush1.bf16.msra.mxu0 0
    %59 = vmatprep.subr.bf16.mxu0 0
    %60 = vmatpush1.bf16.msra.mxu0 0
    %61 = vmatprep.subr.bf16.mxu0 0
    %62 = vmatpush1.bf16.msra.mxu0 0
    %63 = vmatprep.subr.bf16.mxu0 0
    %64 = vmatpush1.bf16.msra.mxu0 0
    %65 = vmatprep.subr.bf16.mxu0 0
    %66 = vmatpush1.bf16.msra.mxu0 0
    %67 = vmatprep.subr.bf16.mxu0 0
    %68 = vmatpush1.bf16.msra.mxu0 0
    %69 = vmatprep.subr.bf16.mxu0 0
    %70 = vmatpush1.bf16.msra.mxu0 %v50
    %71 = vmatprep.subr.bf16.mxu0 0
    %72 = vmatpush1.bf16.msra.mxu0 %v49
    %73 = vmatprep.subr.bf16.mxu0 0
    %74 = vmatpush2.bf16.msra.mxu0 0
    %75 = vmatprep.subr.bf16.mxu0 0
    %76 = vmatpush2.bf16.msra.mxu0 0
    %77 = vmatprep.subr.bf16.mxu0 0
    %78 = vmatpush2.bf16.msra.mxu0 0
    %79 = vmatprep.subr.bf16.mxu0 0
    %80 = vmatpush2.bf16.msra.mxu0 0
    %81 = vmatprep.subr.bf16.mxu0 0
    %82 = vmatpush2.bf16.msra.mxu0 0
    %83 = vmatprep.subr.bf16.mxu0 0
    %84 = vmatpush2.bf16.msra.mxu0 0
    %85 = vmatprep.subr.bf16.mxu0 0
    %86 = vmatpush2.bf16.msra.mxu0 0
    %87 = vmatprep.subr.bf16.mxu0 0
    %88 = vmatpush2.bf16.msra.mxu0 0
    %89 = vmatprep.mubr.bf16.mxu0 0
    %90 = vmatmul.mubr.bf16.gmra.mxu0 %v55
    %v91 = vpop.f32.mrf.mxu0
    %v92 = vadd.f32 0.0, %v91
    %v93 = vpop.f32.mrf.mxu0
    %v94 = vpop.f32.mrf.mxu0
    %v95 = vadd.f32 0.0, %v94
    %v96 = vpop.f32.mrf.mxu0
    %97 = vdwg.mxu0
    %v98 = vpack.c.bf16 %v95, %v92
    %v100 = vunpack.c.l.b16 %v98
    %v101 = vunpack.c.h.b16 %v98
    %v102 = vpack.c.b16 %v100, %v100
    %v103 = vpack.c.b16 %v101, %v101
    %104 = vrot.lane.b32.xlu0 %v102, 120
    %v105 = vpop.permute.xlu0 %104
    %vm106 = vcmask 64512
    %v108 = vsel %vm106, %v102, 0
    %v111 = vsel %vm106, %v105, 0
    %113 = vmatprep.subr.bf16.mxu0 0
    %114 = vmatpush1.bf16.xpose.msra.mxu0 0
    %115 = vmatprep.subr.bf16.mxu0 0
    %116 = vmatpush1.bf16.xpose.msra.mxu0 0
    %117 = vmatprep.subr.bf16.mxu0 0
    %118 = vmatpush1.bf16.xpose.msra.mxu0 0
    %119 = vmatprep.subr.bf16.mxu0 0
    %120 = vmatpush1.bf16.xpose.msra.mxu0 0
    %121 = vmatprep.subr.bf16.mxu0 0
    %122 = vmatpush1.bf16.xpose.msra.mxu0 0
    %123 = vmatprep.subr.bf16.mxu0 0
    %124 = vmatpush1.bf16.xpose.msra.mxu0 0
    %125 = vmatprep.subr.bf16.mxu0 0
    %126 = vmatpush1.bf16.xpose.msra.mxu0 0
    %127 = vmatprep.subr.bf16.mxu0 0
    %128 = vmatpush1.bf16.xpose.msra.mxu0 %v111
    %129 = vmatprep.subr.bf16.mxu0 0
    %130 = vmatpush2.bf16.xpose.msra.mxu0 0
    %131 = vmatprep.subr.bf16.mxu0 0
    %132 = vmatpush2.bf16.xpose.msra.mxu0 0
    %133 = vmatprep.subr.bf16.mxu0 0
    %134 = vmatpush2.bf16.xpose.msra.mxu0 0
    %135 = vmatprep.subr.bf16.mxu0 0
    %136 = vmatpush2.bf16.xpose.msra.mxu0 0
    %137 = vmatprep.subr.bf16.mxu0 0
    %138 = vmatpush2.bf16.xpose.msra.mxu0 0
    %139 = vmatprep.subr.bf16.mxu0 0
    %140 = vmatpush2.bf16.xpose.msra.mxu0 0
    %141 = vmatprep.subr.bf16.mxu0 0
    %142 = vmatpush2.bf16.xpose.msra.mxu0 0
    %143 = vmatprep.subr.bf16.mxu0 0
    %144 = vmatpush2.bf16.xpose.msra.mxu0 0
    %145 = vmatprep.mubr.bf16.mxu0 0
    %146 = vmatmul.mubr.bf16.gmra.mxu0 %v108
    %v147 = vpop.f32.mrf.mxu0
    %v148 = vadd.f32 0.0, %v147
    %v149 = vpop.f32.mrf.mxu0
    %v150 = vpop.f32.mrf.mxu0
    %v151 = vpop.f32.mrf.mxu0
    %152 = vdwg.mxu0
    %153 = vrot.lane.b32.xlu0 %v103, 120
    %v154 = vpop.permute.xlu0 %153
    %v156 = vsel %vm106, %v103, 0
    %v159 = vsel %vm106, %v154, 0
    %161 = vmatprep.subr.bf16.mxu0 0
    %162 = vmatpush1.bf16.xpose.msra.mxu0 0
    %163 = vmatprep.subr.bf16.mxu0 0
    %164 = vmatpush1.bf16.xpose.msra.mxu0 0
    %165 = vmatprep.subr.bf16.mxu0 0
    %166 = vmatpush1.bf16.xpose.msra.mxu0 0
    %167 = vmatprep.subr.bf16.mxu0 0
    %168 = vmatpush1.bf16.xpose.msra.mxu0 0
    %169 = vmatprep.subr.bf16.mxu0 0
    %170 = vmatpush1.bf16.xpose.msra.mxu0 0
    %171 = vmatprep.subr.bf16.mxu0 0
    %172 = vmatpush1.bf16.xpose.msra.mxu0 0
    %173 = vmatprep.subr.bf16.mxu0 0
    %174 = vmatpush1.bf16.xpose.msra.mxu0 0
    %175 = vmatprep.subr.bf16.mxu0 0
    %176 = vmatpush1.bf16.xpose.msra.mxu0 %v159
    %177 = vmatprep.subr.bf16.mxu0 0
    %178 = vmatpush2.bf16.xpose.msra.mxu0 0
    %179 = vmatprep.subr.bf16.mxu0 0
    %180 = vmatpush2.bf16.xpose.msra.mxu0 0
    %181 = vmatprep.subr.bf16.mxu0 0
    %182 = vmatpush2.bf16.xpose.msra.mxu0 0
    %183 = vmatprep.subr.bf16.mxu0 0
    %184 = vmatpush2.bf16.xpose.msra.mxu0 0
    %185 = vmatprep.subr.bf16.mxu0 0
    %186 = vmatpush2.bf16.xpose.msra.mxu0 0
    %187 = vmatprep.subr.bf16.mxu0 0
    %188 = vmatpush2.bf16.xpose.msra.mxu0 0
    %189 = vmatprep.subr.bf16.mxu0 0
    %190 = vmatpush2.bf16.xpose.msra.mxu0 0
    %191 = vmatprep.subr.bf16.mxu0 0
    %192 = vmatpush2.bf16.xpose.msra.mxu0 0
    %193 = vmatprep.mubr.bf16.mxu0 0
    %194 = vmatmul.mubr.bf16.gmra.mxu0 %v156
    %v195 = vpop.f32.mrf.mxu0
    %v196 = vadd.f32 0.0, %v195
    %v197 = vpop.f32.mrf.mxu0
    %v198 = vpop.f32.mrf.mxu0
    %v199 = vpop.f32.mrf.mxu0
    %200 = vdwg.mxu0
    %v201 = vsel %vm106, %v148, -inf
    %202 = vmax.xlane.f32.xlu0 %v201
    %v203 = vpop.xlane.xlu0 %202
    %v204 = vsel %vm106, %v196, -inf
    %205 = vmax.xlane.f32.xlu0 %v204
    %v206 = vpop.xlane.xlu0 %205
    %v207 = vsub.f32 %v148, %v203
    %v208 = vsub.f32 %v196, %v206
    %v209 = vmul.f32 %v207, 1.442695
    %v210 = vpow.pop %v209
    %v211 = vmul.f32 %v208, 1.442695
    %v212 = vpow.pop %v211
    %v213 = vsel %vm106, %v210, 0.0
    %214 = vadd.xlane.f32.xlu0 %v213
    %v215 = vpop.xlane.xlu0 %214
    %v216 = vsel %vm106, %v212, 0.0
    %217 = vadd.xlane.f32.xlu0 %v216
    %v218 = vpop.xlane.xlu0 %217
    %v219 = vrcp.pop %v215
    %v220 = vrcp.pop %v218
    %v221 = vmul.f32 %v210, %v219
    %v222 = vmul.f32 %v212, %v220
    %v223 = vpack.c.bf16 %v221, %v221
    %v224 = vpack.c.bf16 %v222, %v222
    %225 = vrot.lane.b32.xlu0 %v102, 112
    %v226 = vpop.permute.xlu0 %225
    %v228 = vsel %vm106, %v223, 0
    %vm230 = vcmask 1043456
    %v232 = vsel %vm230, %v226, 0
    %234 = vmatprep.subr.bf16.mxu0 0
    %235 = vmatpush1.bf16.msra.mxu0 0
    %236 = vmatprep.subr.bf16.mxu0 0
    %237 = vmatpush1.bf16.msra.mxu0 0
    %238 = vmatprep.subr.bf16.mxu0 0
    %239 = vmatpush1.bf16.msra.mxu0 0
    %240 = vmatprep.subr.bf16.mxu0 0
    %241 = vmatpush1.bf16.msra.mxu0 0
    %242 = vmatprep.subr.bf16.mxu0 0
    %243 = vmatpush1.bf16.msra.mxu0 0
    %244 = vmatprep.subr.bf16.mxu0 0
    %245 = vmatpush1.bf16.msra.mxu0 0
    %246 = vmatprep.subr.bf16.mxu0 0
    %247 = vmatpush1.bf16.msra.mxu0 0
    %248 = vmatprep.subr.bf16.mxu0 0
    %249 = vmatpush1.bf16.msra.mxu0 %v232
    %250 = vmatprep.subr.bf16.mxu0 0
    %251 = vmatpush2.bf16.msra.mxu0 0
    %252 = vmatprep.subr.bf16.mxu0 0
    %253 = vmatpush2.bf16.msra.mxu0 0
    %254 = vmatprep.subr.bf16.mxu0 0
    %255 = vmatpush2.bf16.msra.mxu0 0
    %256 = vmatprep.subr.bf16.mxu0 0
    %257 = vmatpush2.bf16.msra.mxu0 0
    %258 = vmatprep.subr.bf16.mxu0 0
    %259 = vmatpush2.bf16.msra.mxu0 0
    %260 = vmatprep.subr.bf16.mxu0 0
    %261 = vmatpush2.bf16.msra.mxu0 0
    %262 = vmatprep.subr.bf16.mxu0 0
    %263 = vmatpush2.bf16.msra.mxu0 0
    %264 = vmatprep.subr.bf16.mxu0 0
    %265 = vmatpush2.bf16.msra.mxu0 0
    %266 = vmatprep.mubr.bf16.mxu0 0
    %267 = vmatmul.mubr.bf16.gmra.mxu0 %v228
    %v268 = vpop.f32.mrf.mxu0
    %v269 = vadd.f32 0.0, %v268
    %v270 = vpop.f32.mrf.mxu0
    %v271 = vpop.f32.mrf.mxu0
    %v272 = vpop.f32.mrf.mxu0
    %273 = vdwg.mxu0
    %274 = vrot.lane.b32.xlu0 %v103, 112
    %v275 = vpop.permute.xlu0 %274
    %v277 = vsel %vm106, %v224, 0
    %v280 = vsel %vm230, %v275, 0
    %282 = vmatprep.subr.bf16.mxu0 0
    %283 = vmatpush1.bf16.msra.mxu0 0
    %284 = vmatprep.subr.bf16.mxu0 0
    %285 = vmatpush1.bf16.msra.mxu0 0
    %286 = vmatprep.subr.bf16.mxu0 0
    %287 = vmatpush1.bf16.msra.mxu0 0
    %288 = vmatprep.subr.bf16.mxu0 0
    %289 = vmatpush1.bf16.msra.mxu0 0
    %290 = vmatprep.subr.bf16.mxu0 0
    %291 = vmatpush1.bf16.msra.mxu0 0
    %292 = vmatprep.subr.bf16.mxu0 0
    %293 = vmatpush1.bf16.msra.mxu0 0
    %294 = vmatprep.subr.bf16.mxu0 0
    %295 = vmatpush1.bf16.msra.mxu0 0
    %296 = vmatprep.subr.bf16.mxu0 0
    %297 = vmatpush1.bf16.msra.mxu0 %v280
    %298 = vmatprep.subr.bf16.mxu0 0
    %299 = vmatpush2.bf16.msra.mxu0 0
    %300 = vmatprep.subr.bf16.mxu0 0
    %301 = vmatpush2.bf16.msra.mxu0 0
    %302 = vmatprep.subr.bf16.mxu0 0
    %303 = vmatpush2.bf16.msra.mxu0 0
    %304 = vmatprep.subr.bf16.mxu0 0
    %305 = vmatpush2.bf16.msra.mxu0 0
    %306 = vmatprep.subr.bf16.mxu0 0
    %307 = vmatpush2.bf16.msra.mxu0 0
    %308 = vmatprep.subr.bf16.mxu0 0
    %309 = vmatpush2.bf16.msra.mxu0 0
    %310 = vmatprep.subr.bf16.mxu0 0
    %311 = vmatpush2.bf16.msra.mxu0 0
    %312 = vmatprep.subr.bf16.mxu0 0
    %313 = vmatpush2.bf16.msra.mxu0 0
    %314 = vmatprep.mubr.bf16.mxu0 0
    %315 = vmatmul.mubr.bf16.gmra.mxu0 %v277
    %v316 = vpop.f32.mrf.mxu0
    %v317 = vadd.f32 0.0, %v316
    %v318 = vpop.f32.mrf.mxu0
    %v319 = vpop.f32.mrf.mxu0
    %v320 = vpop.f32.mrf.mxu0
    %321 = vdwg.mxu0
    %v322 = vpack.c.bf16 %v317, %v269
    %v323 = vld [vmem:[%s2] sm:$0xf]
    %s324 = scalar_lea.vmem %s1, 16
    %v325 = vld [vmem:[%s324] sm:$0xf]
    %v326 = vld [vmem:[%s324 + $0x4] sm:$0xf]
    %v327 = vld [vmem:[%s324 + $0x8] sm:$0xf]
    %v328 = vld [vmem:[%s324 + $0xc] sm:$0xf]
    %v333 = vunpack.c.l.b16 %v325
    %v334 = vunpack.c.l.b16 %v326
    %v335 = vunpack.c.l.b16 %v327
    %v336 = vunpack.c.l.b16 %v328
    %v337 = vpack.c.b16 %v334, %v333
    %v338 = vpack.c.b16 %v336, %v335
    %341 = vmatprep.subr.bf16.mxu0 0
    %342 = vmatpush1.bf16.msra.mxu0 0
    %343 = vmatprep.subr.bf16.mxu0 0
    %344 = vmatpush1.bf16.msra.mxu0 0
    %345 = vmatprep.subr.bf16.mxu0 0
    %346 = vmatpush1.bf16.msra.mxu0 0
    %347 = vmatprep.subr.bf16.mxu0 0
    %348 = vmatpush1.bf16.msra.mxu0 0
    %349 = vmatprep.subr.bf16.mxu0 0
    %350 = vmatpush1.bf16.msra.mxu0 0
    %351 = vmatprep.subr.bf16.mxu0 0
    %352 = vmatpush1.bf16.msra.mxu0 0
    %353 = vmatprep.subr.bf16.mxu0 0
    %354 = vmatpush1.bf16.msra.mxu0 %v338
    %355 = vmatprep.subr.bf16.mxu0 0
    %356 = vmatpush1.bf16.msra.mxu0 %v337
    %357 = vmatprep.subr.bf16.mxu0 0
    %358 = vmatpush2.bf16.msra.mxu0 0
    %359 = vmatprep.subr.bf16.mxu0 0
    %360 = vmatpush2.bf16.msra.mxu0 0
    %361 = vmatprep.subr.bf16.mxu0 0
    %362 = vmatpush2.bf16.msra.mxu0 0
    %363 = vmatprep.subr.bf16.mxu0 0
    %364 = vmatpush2.bf16.msra.mxu0 0
    %365 = vmatprep.subr.bf16.mxu0 0
    %366 = vmatpush2.bf16.msra.mxu0 0
    %367 = vmatprep.subr.bf16.mxu0 0
    %368 = vmatpush2.bf16.msra.mxu0 0
    %369 = vmatprep.subr.bf16.mxu0 0
    %370 = vmatpush2.bf16.msra.mxu0 0
    %371 = vmatprep.subr.bf16.mxu0 0
    %372 = vmatpush2.bf16.msra.mxu0 0
    %373 = vmatprep.mubr.bf16.mxu0 0
    %374 = vmatmul.mubr.bf16.gmra.mxu0 %v55
    %v375 = vpop.f32.mrf.mxu0
    %v376 = vadd.f32 0.0, %v375
    %v377 = vpop.f32.mrf.mxu0
    %v378 = vpop.f32.mrf.mxu0
    %v379 = vadd.f32 0.0, %v378
    %v380 = vpop.f32.mrf.mxu0
    %381 = vdwg.mxu0
    %v382 = vpack.c.bf16 %v379, %v376
    %v384 = vunpack.c.l.b16 %v382
    %v385 = vunpack.c.h.b16 %v382
    %v386 = vpack.c.b16 %v384, %v384
    %v387 = vpack.c.b16 %v385, %v385
    %388 = vrot.lane.b32.xlu0 %v386, 120
    %v389 = vpop.permute.xlu0 %388
    %v391 = vsel %vm106, %v386, 0
    %v394 = vsel %vm106, %v389, 0
    %396 = vmatprep.subr.bf16.mxu0 0
    %397 = vmatpush1.bf16.xpose.msra.mxu0 0
    %398 = vmatprep.subr.bf16.mxu0 0
    %399 = vmatpush1.bf16.xpose.msra.mxu0 0
    %400 = vmatprep.subr.bf16.mxu0 0
    %401 = vmatpush1.bf16.xpose.msra.mxu0 0
    %402 = vmatprep.subr.bf16.mxu0 0
    %403 = vmatpush1.bf16.xpose.msra.mxu0 0
    %404 = vmatprep.subr.bf16.mxu0 0
    %405 = vmatpush1.bf16.xpose.msra.mxu0 0
    %406 = vmatprep.subr.bf16.mxu0 0
    %407 = vmatpush1.bf16.xpose.msra.mxu0 0
    %408 = vmatprep.subr.bf16.mxu0 0
    %409 = vmatpush1.bf16.xpose.msra.mxu0 0
    %410 = vmatprep.subr.bf16.mxu0 0
    %411 = vmatpush1.bf16.xpose.msra.mxu0 %v394
    %412 = vmatprep.subr.bf16.mxu0 0
    %413 = vmatpush2.bf16.xpose.msra.mxu0 0
    %414 = vmatprep.subr.bf16.mxu0 0
    %415 = vmatpush2.bf16.xpose.msra.mxu0 0
    %416 = vmatprep.subr.bf16.mxu0 0
    %417 = vmatpush2.bf16.xpose.msra.mxu0 0
    %418 = vmatprep.subr.bf16.mxu0 0
    %419 = vmatpush2.bf16.xpose.msra.mxu0 0
    %420 = vmatprep.subr.bf16.mxu0 0
    %421 = vmatpush2.bf16.xpose.msra.mxu0 0
    %422 = vmatprep.subr.bf16.mxu0 0
    %423 = vmatpush2.bf16.xpose.msra.mxu0 0
    %424 = vmatprep.subr.bf16.mxu0 0
    %425 = vmatpush2.bf16.xpose.msra.mxu0 0
    %426 = vmatprep.subr.bf16.mxu0 0
    %427 = vmatpush2.bf16.xpose.msra.mxu0 0
    %428 = vmatprep.mubr.bf16.mxu0 0
    %429 = vmatmul.mubr.bf16.gmra.mxu0 %v391
    %v430 = vpop.f32.mrf.mxu0
    %v431 = vadd.f32 0.0, %v430
    %v432 = vpop.f32.mrf.mxu0
    %v433 = vpop.f32.mrf.mxu0
    %v434 = vpop.f32.mrf.mxu0
    %435 = vdwg.mxu0
    %436 = vrot.lane.b32.xlu0 %v387, 120
    %v437 = vpop.permute.xlu0 %436
    %v439 = vsel %vm106, %v387, 0
    %v442 = vsel %vm106, %v437, 0
    %444 = vmatprep.subr.bf16.mxu0 0
    %445 = vmatpush1.bf16.xpose.msra.mxu0 0
    %446 = vmatprep.subr.bf16.mxu0 0
    %447 = vmatpush1.bf16.xpose.msra.mxu0 0
    %448 = vmatprep.subr.bf16.mxu0 0
    %449 = vmatpush1.bf16.xpose.msra.mxu0 0
    %450 = vmatprep.subr.bf16.mxu0 0
    %451 = vmatpush1.bf16.xpose.msra.mxu0 0
    %452 = vmatprep.subr.bf16.mxu0 0
    %453 = vmatpush1.bf16.xpose.msra.mxu0 0
    %454 = vmatprep.subr.bf16.mxu0 0
    %455 = vmatpush1.bf16.xpose.msra.mxu0 0
    %456 = vmatprep.subr.bf16.mxu0 0
    %457 = vmatpush1.bf16.xpose.msra.mxu0 0
    %458 = vmatprep.subr.bf16.mxu0 0
    %459 = vmatpush1.bf16.xpose.msra.mxu0 %v442
    %460 = vmatprep.subr.bf16.mxu0 0
    %461 = vmatpush2.bf16.xpose.msra.mxu0 0
    %462 = vmatprep.subr.bf16.mxu0 0
    %463 = vmatpush2.bf16.xpose.msra.mxu0 0
    %464 = vmatprep.subr.bf16.mxu0 0
    %465 = vmatpush2.bf16.xpose.msra.mxu0 0
    %466 = vmatprep.subr.bf16.mxu0 0
    %467 = vmatpush2.bf16.xpose.msra.mxu0 0
    %468 = vmatprep.subr.bf16.mxu0 0
    %469 = vmatpush2.bf16.xpose.msra.mxu0 0
    %470 = vmatprep.subr.bf16.mxu0 0
    %471 = vmatpush2.bf16.xpose.msra.mxu0 0
    %472 = vmatprep.subr.bf16.mxu0 0
    %473 = vmatpush2.bf16.xpose.msra.mxu0 0
    %474 = vmatprep.subr.bf16.mxu0 0
    %475 = vmatpush2.bf16.xpose.msra.mxu0 0
    %476 = vmatprep.mubr.bf16.mxu0 0
    %477 = vmatmul.mubr.bf16.gmra.mxu0 %v439
    %v478 = vpop.f32.mrf.mxu0
    %v479 = vadd.f32 0.0, %v478
    %v480 = vpop.f32.mrf.mxu0
    %v481 = vpop.f32.mrf.mxu0
    %v482 = vpop.f32.mrf.mxu0
    %483 = vdwg.mxu0
    %v484 = vsel %vm106, %v431, -inf
    %485 = vmax.xlane.f32.xlu0 %v484
    %v486 = vpop.xlane.xlu0 %485
    %v487 = vsel %vm106, %v479, -inf
    %488 = vmax.xlane.f32.xlu0 %v487
    %v489 = vpop.xlane.xlu0 %488
    %v490 = vsub.f32 %v431, %v486
    %v491 = vsub.f32 %v479, %v489
    %v492 = vmul.f32 %v490, 1.442695
    %v493 = vpow.pop %v492
    %v494 = vmul.f32 %v491, 1.442695
    %v495 = vpow.pop %v494
    %v496 = vsel %vm106, %v493, 0.0
    %497 = vadd.xlane.f32.xlu0 %v496
    %v498 = vpop.xlane.xlu0 %497
    %v499 = vsel %vm106, %v495, 0.0
    %500 = vadd.xlane.f32.xlu0 %v499
    %v501 = vpop.xlane.xlu0 %500
    %v502 = vrcp.pop %v498
    %v503 = vrcp.pop %v501
    %v504 = vmul.f32 %v493, %v502
    %v505 = vmul.f32 %v495, %v503
    %v506 = vpack.c.bf16 %v504, %v504
    %v507 = vpack.c.bf16 %v505, %v505
    %508 = vrot.lane.b32.xlu0 %v386, 112
    %v509 = vpop.permute.xlu0 %508
    %v511 = vsel %vm106, %v506, 0
    %v514 = vsel %vm230, %v509, 0
    %516 = vmatprep.subr.bf16.mxu0 0
    %517 = vmatpush1.bf16.msra.mxu0 0
    %518 = vmatprep.subr.bf16.mxu0 0
    %519 = vmatpush1.bf16.msra.mxu0 0
    %520 = vmatprep.subr.bf16.mxu0 0
    %521 = vmatpush1.bf16.msra.mxu0 0
    %522 = vmatprep.subr.bf16.mxu0 0
    %523 = vmatpush1.bf16.msra.mxu0 0
    %524 = vmatprep.subr.bf16.mxu0 0
    %525 = vmatpush1.bf16.msra.mxu0 0
    %526 = vmatprep.subr.bf16.mxu0 0
    %527 = vmatpush1.bf16.msra.mxu0 0
    %528 = vmatprep.subr.bf16.mxu0 0
    %529 = vmatpush1.bf16.msra.mxu0 0
    %530 = vmatprep.subr.bf16.mxu0 0
    %531 = vmatpush1.bf16.msra.mxu0 %v514
    %532 = vmatprep.subr.bf16.mxu0 0
    %533 = vmatpush2.bf16.msra.mxu0 0
    %534 = vmatprep.subr.bf16.mxu0 0
    %535 = vmatpush2.bf16.msra.mxu0 0
    %536 = vmatprep.subr.bf16.mxu0 0
    %537 = vmatpush2.bf16.msra.mxu0 0
    %538 = vmatprep.subr.bf16.mxu0 0
    %539 = vmatpush2.bf16.msra.mxu0 0
    %540 = vmatprep.subr.bf16.mxu0 0
    %541 = vmatpush2.bf16.msra.mxu0 0
    %542 = vmatprep.subr.bf16.mxu0 0
    %543 = vmatpush2.bf16.msra.mxu0 0
    %544 = vmatprep.subr.bf16.mxu0 0
    %545 = vmatpush2.bf16.msra.mxu0 0
    %546 = vmatprep.subr.bf16.mxu0 0
    %547 = vmatpush2.bf16.msra.mxu0 0
    %548 = vmatprep.mubr.bf16.mxu0 0
    %549 = vmatmul.mubr.bf16.gmra.mxu0 %v511
    %v550 = vpop.f32.mrf.mxu0
    %v551 = vadd.f32 0.0, %v550
    %v552 = vpop.f32.mrf.mxu0
    %v553 = vpop.f32.mrf.mxu0
    %v554 = vpop.f32.mrf.mxu0
    %555 = vdwg.mxu0
    %556 = vrot.lane.b32.xlu0 %v387, 112
    %v557 = vpop.permute.xlu0 %556
    %v559 = vsel %vm106, %v507, 0
    %v562 = vsel %vm230, %v557, 0
    %564 = vmatprep.subr.bf16.mxu0 0
    %565 = vmatpush1.bf16.msra.mxu0 0
    %566 = vmatprep.subr.bf16.mxu0 0
    %567 = vmatpush1.bf16.msra.mxu0 0
    %568 = vmatprep.subr.bf16.mxu0 0
    %569 = vmatpush1.bf16.msra.mxu0 0
    %570 = vmatprep.subr.bf16.mxu0 0
    %571 = vmatpush1.bf16.msra.mxu0 0
    %572 = vmatprep.subr.bf16.mxu0 0
    %573 = vmatpush1.bf16.msra.mxu0 0
    %574 = vmatprep.subr.bf16.mxu0 0
    %575 = vmatpush1.bf16.msra.mxu0 0
    %576 = vmatprep.subr.bf16.mxu0 0
    %577 = vmatpush1.bf16.msra.mxu0 0
    %578 = vmatprep.subr.bf16.mxu0 0
    %579 = vmatpush1.bf16.msra.mxu0 %v562
    %580 = vmatprep.subr.bf16.mxu0 0
    %581 = vmatpush2.bf16.msra.mxu0 0
    %582 = vmatprep.subr.bf16.mxu0 0
    %583 = vmatpush2.bf16.msra.mxu0 0
    %584 = vmatprep.subr.bf16.mxu0 0
    %585 = vmatpush2.bf16.msra.mxu0 0
    %586 = vmatprep.subr.bf16.mxu0 0
    %587 = vmatpush2.bf16.msra.mxu0 0
    %588 = vmatprep.subr.bf16.mxu0 0
    %589 = vmatpush2.bf16.msra.mxu0 0
    %590 = vmatprep.subr.bf16.mxu0 0
    %591 = vmatpush2.bf16.msra.mxu0 0
    %592 = vmatprep.subr.bf16.mxu0 0
    %593 = vmatpush2.bf16.msra.mxu0 0
    %594 = vmatprep.subr.bf16.mxu0 0
    %595 = vmatpush2.bf16.msra.mxu0 0
    %596 = vmatprep.mubr.bf16.mxu0 0
    %597 = vmatmul.mubr.bf16.gmra.mxu0 %v559
    %v598 = vpop.f32.mrf.mxu0
    %v599 = vadd.f32 0.0, %v598
    %v600 = vpop.f32.mrf.mxu0
    %v601 = vpop.f32.mrf.mxu0
    %v602 = vpop.f32.mrf.mxu0
    %603 = vdwg.mxu0
    %v604 = vpack.c.bf16 %v599, %v551
    %s605 = scalar_lea.vmem %s2, 4
    %v606 = vld [vmem:[%s605] sm:$0xf]
    %v608 = vsel %vm106, %v604, 0
    %v611 = vsel %vm230, %v606, 0
    %613 = vmatprep.subr.bf16.mxu0 0
    %614 = vmatpush1.bf16.msra.mxu0 0
    %615 = vmatprep.subr.bf16.mxu0 0
    %616 = vmatpush1.bf16.msra.mxu0 0
    %617 = vmatprep.subr.bf16.mxu0 0
    %618 = vmatpush1.bf16.msra.mxu0 0
    %619 = vmatprep.subr.bf16.mxu0 0
    %620 = vmatpush1.bf16.msra.mxu0 0
    %621 = vmatprep.subr.bf16.mxu0 0
    %622 = vmatpush1.bf16.msra.mxu0 0
    %623 = vmatprep.subr.bf16.mxu0 0
    %624 = vmatpush1.bf16.msra.mxu0 0
    %625 = vmatprep.subr.bf16.mxu0 0
    %626 = vmatpush1.bf16.msra.mxu0 0
    %627 = vmatprep.subr.bf16.mxu0 0
    %628 = vmatpush1.bf16.msra.mxu0 %v611
    %629 = vmatprep.subr.bf16.mxu0 0
    %630 = vmatpush2.bf16.msra.mxu0 0
    %631 = vmatprep.subr.bf16.mxu0 0
    %632 = vmatpush2.bf16.msra.mxu0 0
    %633 = vmatprep.subr.bf16.mxu0 0
    %634 = vmatpush2.bf16.msra.mxu0 0
    %635 = vmatprep.subr.bf16.mxu0 0
    %636 = vmatpush2.bf16.msra.mxu0 0
    %637 = vmatprep.subr.bf16.mxu0 0
    %638 = vmatpush2.bf16.msra.mxu0 0
    %639 = vmatprep.subr.bf16.mxu0 0
    %640 = vmatpush2.bf16.msra.mxu0 0
    %641 = vmatprep.subr.bf16.mxu0 0
    %642 = vmatpush2.bf16.msra.mxu0 0
    %643 = vmatprep.subr.bf16.mxu0 0
    %644 = vmatpush2.bf16.msra.mxu0 0
    %645 = vmatprep.mubr.bf16.mxu0 0
    %646 = vmatmul.mubr.bf16.gmra.mxu0 %v608
    %v647 = vpop.f32.mrf.mxu0
    %v648 = vadd.f32 0.0, %v647
    %v649 = vpop.f32.mrf.mxu0
    %v650 = vpop.f32.mrf.mxu0
    %v651 = vadd.f32 0.0, %v650
    %v652 = vpop.f32.mrf.mxu0
    %653 = vdwg.mxu0
    %v655 = vsel %vm106, %v322, 0
    %v658 = vsel %vm230, %v323, 0
    %660 = vmatprep.subr.bf16.mxu0 0
    %661 = vmatpush1.bf16.msra.mxu0 0
    %662 = vmatprep.subr.bf16.mxu0 0
    %663 = vmatpush1.bf16.msra.mxu0 0
    %664 = vmatprep.subr.bf16.mxu0 0
    %665 = vmatpush1.bf16.msra.mxu0 0
    %666 = vmatprep.subr.bf16.mxu0 0
    %667 = vmatpush1.bf16.msra.mxu0 0
    %668 = vmatprep.subr.bf16.mxu0 0
    %669 = vmatpush1.bf16.msra.mxu0 0
    %670 = vmatprep.subr.bf16.mxu0 0
    %671 = vmatpush1.bf16.msra.mxu0 0
    %672 = vmatprep.subr.bf16.mxu0 0
    %673 = vmatpush1.bf16.msra.mxu0 0
    %674 = vmatprep.subr.bf16.mxu0 0
    %675 = vmatpush1.bf16.msra.mxu0 %v658
    %676 = vmatprep.subr.bf16.mxu0 0
    %677 = vmatpush2.bf16.msra.mxu0 0
    %678 = vmatprep.subr.bf16.mxu0 0
    %679 = vmatpush2.bf16.msra.mxu0 0
    %680 = vmatprep.subr.bf16.mxu0 0
    %681 = vmatpush2.bf16.msra.mxu0 0
    %682 = vmatprep.subr.bf16.mxu0 0
    %683 = vmatpush2.bf16.msra.mxu0 0
    %684 = vmatprep.subr.bf16.mxu0 0
    %685 = vmatpush2.bf16.msra.mxu0 0
    %686 = vmatprep.subr.bf16.mxu0 0
    %687 = vmatpush2.bf16.msra.mxu0 0
    %688 = vmatprep.subr.bf16.mxu0 0
    %689 = vmatpush2.bf16.msra.mxu0 0
    %690 = vmatprep.subr.bf16.mxu0 0
    %691 = vmatpush2.bf16.msra.mxu0 0
    %692 = vmatprep.mubr.bf16.mxu0 0
    %693 = vmatmul.mubr.bf16.gmra.mxu0 %v655
    %v694 = vpop.f32.mrf.mxu0
    %v695 = vadd.f32 %v648, %v694
    %v696 = vpop.f32.mrf.mxu0
    %v697 = vpop.f32.mrf.mxu0
    %v698 = vadd.f32 %v651, %v697
    %v699 = vpop.f32.mrf.mxu0
    %700 = vdwg.mxu0
    %s701 = scalar_lea.vmem %s1, 32
    %v702 = vld [vmem:[%s701] sm:$0xf]
    %v703 = vld [vmem:[%s701 + $0x4] sm:$0xf]
    %v704 = vld [vmem:[%s701 + $0x8] sm:$0xf]
    %v705 = vld [vmem:[%s701 + $0xc] sm:$0xf]
    %v710 = vunpack.c.l.b16 %v702
    %v711 = vunpack.c.l.b16 %v703
    %v712 = vunpack.c.l.b16 %v704
    %v713 = vunpack.c.l.b16 %v705
    %v714 = vpack.c.b16 %v711, %v710
    %v715 = vpack.c.b16 %v713, %v712
    %718 = vmatprep.subr.bf16.mxu0 0
    %719 = vmatpush1.bf16.msra.mxu0 0
    %720 = vmatprep.subr.bf16.mxu0 0
    %721 = vmatpush1.bf16.msra.mxu0 0
    %722 = vmatprep.subr.bf16.mxu0 0
    %723 = vmatpush1.bf16.msra.mxu0 0
    %724 = vmatprep.subr.bf16.mxu0 0
    %725 = vmatpush1.bf16.msra.mxu0 0
    %726 = vmatprep.subr.bf16.mxu0 0
    %727 = vmatpush1.bf16.msra.mxu0 0
    %728 = vmatprep.subr.bf16.mxu0 0
    %729 = vmatpush1.bf16.msra.mxu0 0
    %730 = vmatprep.subr.bf16.mxu0 0
    %731 = vmatpush1.bf16.msra.mxu0 %v715
    %732 = vmatprep.subr.bf16.mxu0 0
    %733 = vmatpush1.bf16.msra.mxu0 %v714
    %734 = vmatprep.subr.bf16.mxu0 0
    %735 = vmatpush2.bf16.msra.mxu0 0
    %736 = vmatprep.subr.bf16.mxu0 0
    %737 = vmatpush2.bf16.msra.mxu0 0
    %738 = vmatprep.subr.bf16.mxu0 0
    %739 = vmatpush2.bf16.msra.mxu0 0
    %740 = vmatprep.subr.bf16.mxu0 0
    %741 = vmatpush2.bf16.msra.mxu0 0
    %742 = vmatprep.subr.bf16.mxu0 0
    %743 = vmatpush2.bf16.msra.mxu0 0
    %744 = vmatprep.subr.bf16.mxu0 0
    %745 = vmatpush2.bf16.msra.mxu0 0
    %746 = vmatprep.subr.bf16.mxu0 0
    %747 = vmatpush2.bf16.msra.mxu0 0
    %748 = vmatprep.subr.bf16.mxu0 0
    %749 = vmatpush2.bf16.msra.mxu0 0
    %750 = vmatprep.mubr.bf16.mxu0 0
    %751 = vmatmul.mubr.bf16.gmra.mxu0 %v55
    %v752 = vpop.f32.mrf.mxu0
    %v753 = vadd.f32 0.0, %v752
    %v754 = vpop.f32.mrf.mxu0
    %v755 = vpop.f32.mrf.mxu0
    %v756 = vadd.f32 0.0, %v755
    %v757 = vpop.f32.mrf.mxu0
    %758 = vdwg.mxu0
    %v759 = vpack.c.bf16 %v756, %v753
    %v761 = vunpack.c.l.b16 %v759
    %v762 = vunpack.c.h.b16 %v759
    %v763 = vpack.c.b16 %v761, %v761
    %v764 = vpack.c.b16 %v762, %v762
    %765 = vrot.lane.b32.xlu0 %v763, 120
    %v766 = vpop.permute.xlu0 %765
    %v768 = vsel %vm106, %v763, 0
    %v771 = vsel %vm106, %v766, 0
    %773 = vmatprep.subr.bf16.mxu0 0
    %774 = vmatpush1.bf16.xpose.msra.mxu0 0
    %775 = vmatprep.subr.bf16.mxu0 0
    %776 = vmatpush1.bf16.xpose.msra.mxu0 0
    %777 = vmatprep.subr.bf16.mxu0 0
    %778 = vmatpush1.bf16.xpose.msra.mxu0 0
    %779 = vmatprep.subr.bf16.mxu0 0
    %780 = vmatpush1.bf16.xpose.msra.mxu0 0
    %781 = vmatprep.subr.bf16.mxu0 0
    %782 = vmatpush1.bf16.xpose.msra.mxu0 0
    %783 = vmatprep.subr.bf16.mxu0 0
    %784 = vmatpush1.bf16.xpose.msra.mxu0 0
    %785 = vmatprep.subr.bf16.mxu0 0
    %786 = vmatpush1.bf16.xpose.msra.mxu0 0
    %787 = vmatprep.subr.bf16.mxu0 0
    %788 = vmatpush1.bf16.xpose.msra.mxu0 %v771
    %789 = vmatprep.subr.bf16.mxu0 0
    %790 = vmatpush2.bf16.xpose.msra.mxu0 0
    %791 = vmatprep.subr.bf16.mxu0 0
    %792 = vmatpush2.bf16.xpose.msra.mxu0 0
    %793 = vmatprep.subr.bf16.mxu0 0
    %794 = vmatpush2.bf16.xpose.msra.mxu0 0
    %795 = vmatprep.subr.bf16.mxu0 0
    %796 = vmatpush2.bf16.xpose.msra.mxu0 0
    %797 = vmatprep.subr.bf16.mxu0 0
    %798 = vmatpush2.bf16.xpose.msra.mxu0 0
    %799 = vmatprep.subr.bf16.mxu0 0
    %800 = vmatpush2.bf16.xpose.msra.mxu0 0
    %801 = vmatprep.subr.bf16.mxu0 0
    %802 = vmatpush2.bf16.xpose.msra.mxu0 0
    %803 = vmatprep.subr.bf16.mxu0 0
    %804 = vmatpush2.bf16.xpose.msra.mxu0 0
    %805 = vmatprep.mubr.bf16.mxu0 0
    %806 = vmatmul.mubr.bf16.gmra.mxu0 %v768
    %v807 = vpop.f32.mrf.mxu0
    %v808 = vadd.f32 0.0, %v807
    %v809 = vpop.f32.mrf.mxu0
    %v810 = vpop.f32.mrf.mxu0
    %v811 = vpop.f32.mrf.mxu0
    %812 = vdwg.mxu0
    %813 = vrot.lane.b32.xlu0 %v764, 120
    %v814 = vpop.permute.xlu0 %813
    %v816 = vsel %vm106, %v764, 0
    %v819 = vsel %vm106, %v814, 0
    %821 = vmatprep.subr.bf16.mxu0 0
    %822 = vmatpush1.bf16.xpose.msra.mxu0 0
    %823 = vmatprep.subr.bf16.mxu0 0
    %824 = vmatpush1.bf16.xpose.msra.mxu0 0
    %825 = vmatprep.subr.bf16.mxu0 0
    %826 = vmatpush1.bf16.xpose.msra.mxu0 0
    %827 = vmatprep.subr.bf16.mxu0 0
    %828 = vmatpush1.bf16.xpose.msra.mxu0 0
    %829 = vmatprep.subr.bf16.mxu0 0
    %830 = vmatpush1.bf16.xpose.msra.mxu0 0
    %831 = vmatprep.subr.bf16.mxu0 0
    %832 = vmatpush1.bf16.xpose.msra.mxu0 0
    %833 = vmatprep.subr.bf16.mxu0 0
    %834 = vmatpush1.bf16.xpose.msra.mxu0 0
    %835 = vmatprep.subr.bf16.mxu0 0
    %836 = vmatpush1.bf16.xpose.msra.mxu0 %v819
    %837 = vmatprep.subr.bf16.mxu0 0
    %838 = vmatpush2.bf16.xpose.msra.mxu0 0
    %839 = vmatprep.subr.bf16.mxu0 0
    %840 = vmatpush2.bf16.xpose.msra.mxu0 0
    %841 = vmatprep.subr.bf16.mxu0 0
    %842 = vmatpush2.bf16.xpose.msra.mxu0 0
    %843 = vmatprep.subr.bf16.mxu0 0
    %844 = vmatpush2.bf16.xpose.msra.mxu0 0
    %845 = vmatprep.subr.bf16.mxu0 0
    %846 = vmatpush2.bf16.xpose.msra.mxu0 0
    %847 = vmatprep.subr.bf16.mxu0 0
    %848 = vmatpush2.bf16.xpose.msra.mxu0 0
    %849 = vmatprep.subr.bf16.mxu0 0
    %850 = vmatpush2.bf16.xpose.msra.mxu0 0
    %851 = vmatprep.subr.bf16.mxu0 0
    %852 = vmatpush2.bf16.xpose.msra.mxu0 0
    %853 = vmatprep.mubr.bf16.mxu0 0
    %854 = vmatmul.mubr.bf16.gmra.mxu0 %v816
    %v855 = vpop.f32.mrf.mxu0
    %v856 = vadd.f32 0.0, %v855
    %v857 = vpop.f32.mrf.mxu0
    %v858 = vpop.f32.mrf.mxu0
    %v859 = vpop.f32.mrf.mxu0
    %860 = vdwg.mxu0
    %v861 = vsel %vm106, %v808, -inf
    %862 = vmax.xlane.f32.xlu0 %v861
    %v863 = vpop.xlane.xlu0 %862
    %v864 = vsel %vm106, %v856, -inf
    %865 = vmax.xlane.f32.xlu0 %v864
    %v866 = vpop.xlane.xlu0 %865
    %v867 = vsub.f32 %v808, %v863
    %v868 = vsub.f32 %v856, %v866
    %v869 = vmul.f32 %v867, 1.442695
    %v870 = vpow.pop %v869
    %v871 = vmul.f32 %v868, 1.442695
    %v872 = vpow.pop %v871
    %v873 = vsel %vm106, %v870, 0.0
    %874 = vadd.xlane.f32.xlu0 %v873
    %v875 = vpop.xlane.xlu0 %874
    %v876 = vsel %vm106, %v872, 0.0
    %877 = vadd.xlane.f32.xlu0 %v876
    %v878 = vpop.xlane.xlu0 %877
    %v879 = vrcp.pop %v875
    %v880 = vrcp.pop %v878
    %v881 = vmul.f32 %v870, %v879
    %v882 = vmul.f32 %v872, %v880
    %v883 = vpack.c.bf16 %v881, %v881
    %v884 = vpack.c.bf16 %v882, %v882
    %885 = vrot.lane.b32.xlu0 %v763, 112
    %v886 = vpop.permute.xlu0 %885
    %v888 = vsel %vm106, %v883, 0
    %v891 = vsel %vm230, %v886, 0
    %893 = vmatprep.subr.bf16.mxu0 0
    %894 = vmatpush1.bf16.msra.mxu0 0
    %895 = vmatprep.subr.bf16.mxu0 0
    %896 = vmatpush1.bf16.msra.mxu0 0
    %897 = vmatprep.subr.bf16.mxu0 0
    %898 = vmatpush1.bf16.msra.mxu0 0
    %899 = vmatprep.subr.bf16.mxu0 0
    %900 = vmatpush1.bf16.msra.mxu0 0
    %901 = vmatprep.subr.bf16.mxu0 0
    %902 = vmatpush1.bf16.msra.mxu0 0
    %903 = vmatprep.subr.bf16.mxu0 0
    %904 = vmatpush1.bf16.msra.mxu0 0
    %905 = vmatprep.subr.bf16.mxu0 0
    %906 = vmatpush1.bf16.msra.mxu0 0
    %907 = vmatprep.subr.bf16.mxu0 0
    %908 = vmatpush1.bf16.msra.mxu0 %v891
    %909 = vmatprep.subr.bf16.mxu0 0
    %910 = vmatpush2.bf16.msra.mxu0 0
    %911 = vmatprep.subr.bf16.mxu0 0
    %912 = vmatpush2.bf16.msra.mxu0 0
    %913 = vmatprep.subr.bf16.mxu0 0
    %914 = vmatpush2.bf16.msra.mxu0 0
    %915 = vmatprep.subr.bf16.mxu0 0
    %916 = vmatpush2.bf16.msra.mxu0 0
    %917 = vmatprep.subr.bf16.mxu0 0
    %918 = vmatpush2.bf16.msra.mxu0 0
    %919 = vmatprep.subr.bf16.mxu0 0
    %920 = vmatpush2.bf16.msra.mxu0 0
    %921 = vmatprep.subr.bf16.mxu0 0
    %922 = vmatpush2.bf16.msra.mxu0 0
    %923 = vmatprep.subr.bf16.mxu0 0
    %924 = vmatpush2.bf16.msra.mxu0 0
    %925 = vmatprep.mubr.bf16.mxu0 0
    %926 = vmatmul.mubr.bf16.gmra.mxu0 %v888
    %v927 = vpop.f32.mrf.mxu0
    %v928 = vadd.f32 0.0, %v927
    %v929 = vpop.f32.mrf.mxu0
    %v930 = vpop.f32.mrf.mxu0
    %v931 = vpop.f32.mrf.mxu0
    %932 = vdwg.mxu0
    %933 = vrot.lane.b32.xlu0 %v764, 112
    %v934 = vpop.permute.xlu0 %933
    %v936 = vsel %vm106, %v884, 0
    %v939 = vsel %vm230, %v934, 0
    %941 = vmatprep.subr.bf16.mxu0 0
    %942 = vmatpush1.bf16.msra.mxu0 0
    %943 = vmatprep.subr.bf16.mxu0 0
    %944 = vmatpush1.bf16.msra.mxu0 0
    %945 = vmatprep.subr.bf16.mxu0 0
    %946 = vmatpush1.bf16.msra.mxu0 0
    %947 = vmatprep.subr.bf16.mxu0 0
    %948 = vmatpush1.bf16.msra.mxu0 0
    %949 = vmatprep.subr.bf16.mxu0 0
    %950 = vmatpush1.bf16.msra.mxu0 0
    %951 = vmatprep.subr.bf16.mxu0 0
    %952 = vmatpush1.bf16.msra.mxu0 0
    %953 = vmatprep.subr.bf16.mxu0 0
    %954 = vmatpush1.bf16.msra.mxu0 0
    %955 = vmatprep.subr.bf16.mxu0 0
    %956 = vmatpush1.bf16.msra.mxu0 %v939
    %957 = vmatprep.subr.bf16.mxu0 0
    %958 = vmatpush2.bf16.msra.mxu0 0
    %959 = vmatprep.subr.bf16.mxu0 0
    %960 = vmatpush2.bf16.msra.mxu0 0
    %961 = vmatprep.subr.bf16.mxu0 0
    %962 = vmatpush2.bf16.msra.mxu0 0
    %963 = vmatprep.subr.bf16.mxu0 0
    %964 = vmatpush2.bf16.msra.mxu0 0
    %965 = vmatprep.subr.bf16.mxu0 0
    %966 = vmatpush2.bf16.msra.mxu0 0
    %967 = vmatprep.subr.bf16.mxu0 0
    %968 = vmatpush2.bf16.msra.mxu0 0
    %969 = vmatprep.subr.bf16.mxu0 0
    %970 = vmatpush2.bf16.msra.mxu0 0
    %971 = vmatprep.subr.bf16.mxu0 0
    %972 = vmatpush2.bf16.msra.mxu0 0
    %973 = vmatprep.mubr.bf16.mxu0 0
    %974 = vmatmul.mubr.bf16.gmra.mxu0 %v936
    %v975 = vpop.f32.mrf.mxu0
    %v976 = vadd.f32 0.0, %v975
    %v977 = vpop.f32.mrf.mxu0
    %v978 = vpop.f32.mrf.mxu0
    %v979 = vpop.f32.mrf.mxu0
    %980 = vdwg.mxu0
    %v981 = vpack.c.bf16 %v976, %v928
    %s982 = scalar_lea.vmem %s2, 8
    %v983 = vld [vmem:[%s982] sm:$0xf]
    %v985 = vsel %vm106, %v981, 0
    %v988 = vsel %vm230, %v983, 0
    %990 = vmatprep.subr.bf16.mxu0 0
    %991 = vmatpush1.bf16.msra.mxu0 0
    %992 = vmatprep.subr.bf16.mxu0 0
    %993 = vmatpush1.bf16.msra.mxu0 0
    %994 = vmatprep.subr.bf16.mxu0 0
    %995 = vmatpush1.bf16.msra.mxu0 0
    %996 = vmatprep.subr.bf16.mxu0 0
    %997 = vmatpush1.bf16.msra.mxu0 0
    %998 = vmatprep.subr.bf16.mxu0 0
    %999 = vmatpush1.bf16.msra.mxu0 0
    %1000 = vmatprep.subr.bf16.mxu0 0
    %1001 = vmatpush1.bf16.msra.mxu0 0
    %1002 = vmatprep.subr.bf16.mxu0 0
    %1003 = vmatpush1.bf16.msra.mxu0 0
    %1004 = vmatprep.subr.bf16.mxu0 0
    %1005 = vmatpush1.bf16.msra.mxu0 %v988
    %1006 = vmatprep.subr.bf16.mxu0 0
    %1007 = vmatpush2.bf16.msra.mxu0 0
    %1008 = vmatprep.subr.bf16.mxu0 0
    %1009 = vmatpush2.bf16.msra.mxu0 0
    %1010 = vmatprep.subr.bf16.mxu0 0
    %1011 = vmatpush2.bf16.msra.mxu0 0
    %1012 = vmatprep.subr.bf16.mxu0 0
    %1013 = vmatpush2.bf16.msra.mxu0 0
    %1014 = vmatprep.subr.bf16.mxu0 0
    %1015 = vmatpush2.bf16.msra.mxu0 0
    %1016 = vmatprep.subr.bf16.mxu0 0
    %1017 = vmatpush2.bf16.msra.mxu0 0
    %1018 = vmatprep.subr.bf16.mxu0 0
    %1019 = vmatpush2.bf16.msra.mxu0 0
    %1020 = vmatprep.subr.bf16.mxu0 0
    %1021 = vmatpush2.bf16.msra.mxu0 0
    %1022 = vmatprep.mubr.bf16.mxu0 0
    %1023 = vmatmul.mubr.bf16.gmra.mxu0 %v985
    %v1024 = vpop.f32.mrf.mxu0
    %v1025 = vadd.f32 0.0, %v1024
    %v1026 = vpop.f32.mrf.mxu0
    %v1027 = vpop.f32.mrf.mxu0
    %v1028 = vadd.f32 0.0, %v1027
    %v1029 = vpop.f32.mrf.mxu0
    %1030 = vdwg.mxu0
    %v1031 = vadd.f32 %v695, %v1025
    %v1032 = vadd.f32 %v698, %v1028
    %s1033 = scalar_lea.vmem %s1, 48
    %v1034 = vld [vmem:[%s1033] sm:$0xf]
    %v1035 = vld [vmem:[%s1033 + $0x4] sm:$0xf]
    %v1036 = vld [vmem:[%s1033 + $0x8] sm:$0xf]
    %v1037 = vld [vmem:[%s1033 + $0xc] sm:$0xf]
    %v1042 = vunpack.c.l.b16 %v1034
    %v1043 = vunpack.c.l.b16 %v1035
    %v1044 = vunpack.c.l.b16 %v1036
    %v1045 = vunpack.c.l.b16 %v1037
    %v1046 = vpack.c.b16 %v1043, %v1042
    %v1047 = vpack.c.b16 %v1045, %v1044
    %1050 = vmatprep.subr.bf16.mxu0 0
    %1051 = vmatpush1.bf16.msra.mxu0 0
    %1052 = vmatprep.subr.bf16.mxu0 0
    %1053 = vmatpush1.bf16.msra.mxu0 0
    %1054 = vmatprep.subr.bf16.mxu0 0
    %1055 = vmatpush1.bf16.msra.mxu0 0
    %1056 = vmatprep.subr.bf16.mxu0 0
    %1057 = vmatpush1.bf16.msra.mxu0 0
    %1058 = vmatprep.subr.bf16.mxu0 0
    %1059 = vmatpush1.bf16.msra.mxu0 0
    %1060 = vmatprep.subr.bf16.mxu0 0
    %1061 = vmatpush1.bf16.msra.mxu0 0
    %1062 = vmatprep.subr.bf16.mxu0 0
    %1063 = vmatpush1.bf16.msra.mxu0 %v1047
    %1064 = vmatprep.subr.bf16.mxu0 0
    %1065 = vmatpush1.bf16.msra.mxu0 %v1046
    %1066 = vmatprep.subr.bf16.mxu0 0
    %1067 = vmatpush2.bf16.msra.mxu0 0
    %1068 = vmatprep.subr.bf16.mxu0 0
    %1069 = vmatpush2.bf16.msra.mxu0 0
    %1070 = vmatprep.subr.bf16.mxu0 0
    %1071 = vmatpush2.bf16.msra.mxu0 0
    %1072 = vmatprep.subr.bf16.mxu0 0
    %1073 = vmatpush2.bf16.msra.mxu0 0
    %1074 = vmatprep.subr.bf16.mxu0 0
    %1075 = vmatpush2.bf16.msra.mxu0 0
    %1076 = vmatprep.subr.bf16.mxu0 0
    %1077 = vmatpush2.bf16.msra.mxu0 0
    %1078 = vmatprep.subr.bf16.mxu0 0
    %1079 = vmatpush2.bf16.msra.mxu0 0
    %1080 = vmatprep.subr.bf16.mxu0 0
    %1081 = vmatpush2.bf16.msra.mxu0 0
    %1082 = vmatprep.mubr.bf16.mxu0 0
    %1083 = vmatmul.mubr.bf16.gmra.mxu0 %v55
    %v1084 = vpop.f32.mrf.mxu0
    %v1085 = vadd.f32 0.0, %v1084
    %v1086 = vpop.f32.mrf.mxu0
    %v1087 = vpop.f32.mrf.mxu0
    %v1088 = vadd.f32 0.0, %v1087
    %v1089 = vpop.f32.mrf.mxu0
    %1090 = vdwg.mxu0
    %v1091 = vpack.c.bf16 %v1088, %v1085
    %v1093 = vunpack.c.l.b16 %v1091
    %v1094 = vunpack.c.h.b16 %v1091
    %v1095 = vpack.c.b16 %v1093, %v1093
    %v1096 = vpack.c.b16 %v1094, %v1094
    %1097 = vrot.lane.b32.xlu0 %v1095, 120
    %v1098 = vpop.permute.xlu0 %1097
    %v1100 = vsel %vm106, %v1095, 0
    %v1103 = vsel %vm106, %v1098, 0
    %1105 = vmatprep.subr.bf16.mxu0 0
    %1106 = vmatpush1.bf16.xpose.msra.mxu0 0
    %1107 = vmatprep.subr.bf16.mxu0 0
    %1108 = vmatpush1.bf16.xpose.msra.mxu0 0
    %1109 = vmatprep.subr.bf16.mxu0 0
    %1110 = vmatpush1.bf16.xpose.msra.mxu0 0
    %1111 = vmatprep.subr.bf16.mxu0 0
    %1112 = vmatpush1.bf16.xpose.msra.mxu0 0
    %1113 = vmatprep.subr.bf16.mxu0 0
    %1114 = vmatpush1.bf16.xpose.msra.mxu0 0
    %1115 = vmatprep.subr.bf16.mxu0 0
    %1116 = vmatpush1.bf16.xpose.msra.mxu0 0
    %1117 = vmatprep.subr.bf16.mxu0 0
    %1118 = vmatpush1.bf16.xpose.msra.mxu0 0
    %1119 = vmatprep.subr.bf16.mxu0 0
    %1120 = vmatpush1.bf16.xpose.msra.mxu0 %v1103
    %1121 = vmatprep.subr.bf16.mxu0 0
    %1122 = vmatpush2.bf16.xpose.msra.mxu0 0
    %1123 = vmatprep.subr.bf16.mxu0 0
    %1124 = vmatpush2.bf16.xpose.msra.mxu0 0
    %1125 = vmatprep.subr.bf16.mxu0 0
    %1126 = vmatpush2.bf16.xpose.msra.mxu0 0
    %1127 = vmatprep.subr.bf16.mxu0 0
    %1128 = vmatpush2.bf16.xpose.msra.mxu0 0
    %1129 = vmatprep.subr.bf16.mxu0 0
    %1130 = vmatpush2.bf16.xpose.msra.mxu0 0
    %1131 = vmatprep.subr.bf16.mxu0 0
    %1132 = vmatpush2.bf16.xpose.msra.mxu0 0
    %1133 = vmatprep.subr.bf16.mxu0 0
    %1134 = vmatpush2.bf16.xpose.msra.mxu0 0
    %1135 = vmatprep.subr.bf16.mxu0 0
    %1136 = vmatpush2.bf16.xpose.msra.mxu0 0
    %1137 = vmatprep.mubr.bf16.mxu0 0
    %1138 = vmatmul.mubr.bf16.gmra.mxu0 %v1100
    %v1139 = vpop.f32.mrf.mxu0
    %v1140 = vadd.f32 0.0, %v1139
    %v1141 = vpop.f32.mrf.mxu0
    %v1142 = vpop.f32.mrf.mxu0
    %v1143 = vpop.f32.mrf.mxu0
    %1144 = vdwg.mxu0
    %1145 = vrot.lane.b32.xlu0 %v1096, 120
    %v1146 = vpop.permute.xlu0 %1145
    %v1148 = vsel %vm106, %v1096, 0
    %v1151 = vsel %vm106, %v1146, 0
    %1153 = vmatprep.subr.bf16.mxu0 0
    %1154 = vmatpush1.bf16.xpose.msra.mxu0 0
    %1155 = vmatprep.subr.bf16.mxu0 0
    %1156 = vmatpush1.bf16.xpose.msra.mxu0 0
    %1157 = vmatprep.subr.bf16.mxu0 0
    %1158 = vmatpush1.bf16.xpose.msra.mxu0 0
    %1159 = vmatprep.subr.bf16.mxu0 0
    %1160 = vmatpush1.bf16.xpose.msra.mxu0 0
    %1161 = vmatprep.subr.bf16.mxu0 0
    %1162 = vmatpush1.bf16.xpose.msra.mxu0 0
    %1163 = vmatprep.subr.bf16.mxu0 0
    %1164 = vmatpush1.bf16.xpose.msra.mxu0 0
    %1165 = vmatprep.subr.bf16.mxu0 0
    %1166 = vmatpush1.bf16.xpose.msra.mxu0 0
    %1167 = vmatprep.subr.bf16.mxu0 0
    %1168 = vmatpush1.bf16.xpose.msra.mxu0 %v1151
    %1169 = vmatprep.subr.bf16.mxu0 0
    %1170 = vmatpush2.bf16.xpose.msra.mxu0 0
    %1171 = vmatprep.subr.bf16.mxu0 0
    %1172 = vmatpush2.bf16.xpose.msra.mxu0 0
    %1173 = vmatprep.subr.bf16.mxu0 0
    %1174 = vmatpush2.bf16.xpose.msra.mxu0 0
    %1175 = vmatprep.subr.bf16.mxu0 0
    %1176 = vmatpush2.bf16.xpose.msra.mxu0 0
    %1177 = vmatprep.subr.bf16.mxu0 0
    %1178 = vmatpush2.bf16.xpose.msra.mxu0 0
    %1179 = vmatprep.subr.bf16.mxu0 0
    %1180 = vmatpush2.bf16.xpose.msra.mxu0 0
    %1181 = vmatprep.subr.bf16.mxu0 0
    %1182 = vmatpush2.bf16.xpose.msra.mxu0 0
    %1183 = vmatprep.subr.bf16.mxu0 0
    %1184 = vmatpush2.bf16.xpose.msra.mxu0 0
    %1185 = vmatprep.mubr.bf16.mxu0 0
    %1186 = vmatmul.mubr.bf16.gmra.mxu0 %v1148
    %v1187 = vpop.f32.mrf.mxu0
    %v1188 = vadd.f32 0.0, %v1187
    %v1189 = vpop.f32.mrf.mxu0
    %v1190 = vpop.f32.mrf.mxu0
    %v1191 = vpop.f32.mrf.mxu0
    %1192 = vdwg.mxu0
    %v1193 = vsel %vm106, %v1140, -inf
    %1194 = vmax.xlane.f32.xlu0 %v1193
    %v1195 = vpop.xlane.xlu0 %1194
    %v1196 = vsel %vm106, %v1188, -inf
    %1197 = vmax.xlane.f32.xlu0 %v1196
    %v1198 = vpop.xlane.xlu0 %1197
    %v1199 = vsub.f32 %v1140, %v1195
    %v1200 = vsub.f32 %v1188, %v1198
    %v1201 = vmul.f32 %v1199, 1.442695
    %v1202 = vpow.pop %v1201
    %v1203 = vmul.f32 %v1200, 1.442695
    %v1204 = vpow.pop %v1203
    %v1205 = vsel %vm106, %v1202, 0.0
    %1206 = vadd.xlane.f32.xlu0 %v1205
    %v1207 = vpop.xlane.xlu0 %1206
    %v1208 = vsel %vm106, %v1204, 0.0
    %1209 = vadd.xlane.f32.xlu0 %v1208
    %v1210 = vpop.xlane.xlu0 %1209
    %v1211 = vrcp.pop %v1207
    %v1212 = vrcp.pop %v1210
    %v1213 = vmul.f32 %v1202, %v1211
    %v1214 = vmul.f32 %v1204, %v1212
    %v1215 = vpack.c.bf16 %v1213, %v1213
    %v1216 = vpack.c.bf16 %v1214, %v1214
    %1217 = vrot.lane.b32.xlu0 %v1095, 112
    %v1218 = vpop.permute.xlu0 %1217
    %v1220 = vsel %vm106, %v1215, 0
    %v1223 = vsel %vm230, %v1218, 0
    %1225 = vmatprep.subr.bf16.mxu0 0
    %1226 = vmatpush1.bf16.msra.mxu0 0
    %1227 = vmatprep.subr.bf16.mxu0 0
    %1228 = vmatpush1.bf16.msra.mxu0 0
    %1229 = vmatprep.subr.bf16.mxu0 0
    %1230 = vmatpush1.bf16.msra.mxu0 0
    %1231 = vmatprep.subr.bf16.mxu0 0
    %1232 = vmatpush1.bf16.msra.mxu0 0
    %1233 = vmatprep.subr.bf16.mxu0 0
    %1234 = vmatpush1.bf16.msra.mxu0 0
    %1235 = vmatprep.subr.bf16.mxu0 0
    %1236 = vmatpush1.bf16.msra.mxu0 0
    %1237 = vmatprep.subr.bf16.mxu0 0
    %1238 = vmatpush1.bf16.msra.mxu0 0
    %1239 = vmatprep.subr.bf16.mxu0 0
    %1240 = vmatpush1.bf16.msra.mxu0 %v1223
    %1241 = vmatprep.subr.bf16.mxu0 0
    %1242 = vmatpush2.bf16.msra.mxu0 0
    %1243 = vmatprep.subr.bf16.mxu0 0
    %1244 = vmatpush2.bf16.msra.mxu0 0
    %1245 = vmatprep.subr.bf16.mxu0 0
    %1246 = vmatpush2.bf16.msra.mxu0 0
    %1247 = vmatprep.subr.bf16.mxu0 0
    %1248 = vmatpush2.bf16.msra.mxu0 0
    %1249 = vmatprep.subr.bf16.mxu0 0
    %1250 = vmatpush2.bf16.msra.mxu0 0
    %1251 = vmatprep.subr.bf16.mxu0 0
    %1252 = vmatpush2.bf16.msra.mxu0 0
    %1253 = vmatprep.subr.bf16.mxu0 0
    %1254 = vmatpush2.bf16.msra.mxu0 0
    %1255 = vmatprep.subr.bf16.mxu0 0
    %1256 = vmatpush2.bf16.msra.mxu0 0
    %1257 = vmatprep.mubr.bf16.mxu0 0
    %1258 = vmatmul.mubr.bf16.gmra.mxu0 %v1220
    %v1259 = vpop.f32.mrf.mxu0
    %v1260 = vadd.f32 0.0, %v1259
    %v1261 = vpop.f32.mrf.mxu0
    %v1262 = vpop.f32.mrf.mxu0
    %v1263 = vpop.f32.mrf.mxu0
    %1264 = vdwg.mxu0
    %1265 = vrot.lane.b32.xlu0 %v1096, 112
    %v1266 = vpop.permute.xlu0 %1265
    %v1268 = vsel %vm106, %v1216, 0
    %v1271 = vsel %vm230, %v1266, 0
    %1273 = vmatprep.subr.bf16.mxu0 0
    %1274 = vmatpush1.bf16.msra.mxu0 0
    %1275 = vmatprep.subr.bf16.mxu0 0
    %1276 = vmatpush1.bf16.msra.mxu0 0
    %1277 = vmatprep.subr.bf16.mxu0 0
    %1278 = vmatpush1.bf16.msra.mxu0 0
    %1279 = vmatprep.subr.bf16.mxu0 0
    %1280 = vmatpush1.bf16.msra.mxu0 0
    %1281 = vmatprep.subr.bf16.mxu0 0
    %1282 = vmatpush1.bf16.msra.mxu0 0
    %1283 = vmatprep.subr.bf16.mxu0 0
    %1284 = vmatpush1.bf16.msra.mxu0 0
    %1285 = vmatprep.subr.bf16.mxu0 0
    %1286 = vmatpush1.bf16.msra.mxu0 0
    %1287 = vmatprep.subr.bf16.mxu0 0
    %1288 = vmatpush1.bf16.msra.mxu0 %v1271
    %1289 = vmatprep.subr.bf16.mxu0 0
    %1290 = vmatpush2.bf16.msra.mxu0 0
    %1291 = vmatprep.subr.bf16.mxu0 0
    %1292 = vmatpush2.bf16.msra.mxu0 0
    %1293 = vmatprep.subr.bf16.mxu0 0
    %1294 = vmatpush2.bf16.msra.mxu0 0
    %1295 = vmatprep.subr.bf16.mxu0 0
    %1296 = vmatpush2.bf16.msra.mxu0 0
    %1297 = vmatprep.subr.bf16.mxu0 0
    %1298 = vmatpush2.bf16.msra.mxu0 0
    %1299 = vmatprep.subr.bf16.mxu0 0
    %1300 = vmatpush2.bf16.msra.mxu0 0
    %1301 = vmatprep.subr.bf16.mxu0 0
    %1302 = vmatpush2.bf16.msra.mxu0 0
    %1303 = vmatprep.subr.bf16.mxu0 0
    %1304 = vmatpush2.bf16.msra.mxu0 0
    %1305 = vmatprep.mubr.bf16.mxu0 0
    %1306 = vmatmul.mubr.bf16.gmra.mxu0 %v1268
    %v1307 = vpop.f32.mrf.mxu0
    %v1308 = vadd.f32 0.0, %v1307
    %v1309 = vpop.f32.mrf.mxu0
    %v1310 = vpop.f32.mrf.mxu0
    %v1311 = vpop.f32.mrf.mxu0
    %1312 = vdwg.mxu0
    %v1313 = vpack.c.bf16 %v1308, %v1260
    %s1314 = scalar_lea.vmem %s2, 12
    %v1315 = vld [vmem:[%s1314] sm:$0xf]
    %v1317 = vsel %vm106, %v1313, 0
    %v1320 = vsel %vm230, %v1315, 0
    %1322 = vmatprep.subr.bf16.mxu0 0
    %1323 = vmatpush1.bf16.msra.mxu0 0
    %1324 = vmatprep.subr.bf16.mxu0 0
    %1325 = vmatpush1.bf16.msra.mxu0 0
    %1326 = vmatprep.subr.bf16.mxu0 0
    %1327 = vmatpush1.bf16.msra.mxu0 0
    %1328 = vmatprep.subr.bf16.mxu0 0
    %1329 = vmatpush1.bf16.msra.mxu0 0
    %1330 = vmatprep.subr.bf16.mxu0 0
    %1331 = vmatpush1.bf16.msra.mxu0 0
    %1332 = vmatprep.subr.bf16.mxu0 0
    %1333 = vmatpush1.bf16.msra.mxu0 0
    %1334 = vmatprep.subr.bf16.mxu0 0
    %1335 = vmatpush1.bf16.msra.mxu0 0
    %1336 = vmatprep.subr.bf16.mxu0 0
    %1337 = vmatpush1.bf16.msra.mxu0 %v1320
    %1338 = vmatprep.subr.bf16.mxu0 0
    %1339 = vmatpush2.bf16.msra.mxu0 0
    %1340 = vmatprep.subr.bf16.mxu0 0
    %1341 = vmatpush2.bf16.msra.mxu0 0
    %1342 = vmatprep.subr.bf16.mxu0 0
    %1343 = vmatpush2.bf16.msra.mxu0 0
    %1344 = vmatprep.subr.bf16.mxu0 0
    %1345 = vmatpush2.bf16.msra.mxu0 0
    %1346 = vmatprep.subr.bf16.mxu0 0
    %1347 = vmatpush2.bf16.msra.mxu0 0
    %1348 = vmatprep.subr.bf16.mxu0 0
    %1349 = vmatpush2.bf16.msra.mxu0 0
    %1350 = vmatprep.subr.bf16.mxu0 0
    %1351 = vmatpush2.bf16.msra.mxu0 0
    %1352 = vmatprep.subr.bf16.mxu0 0
    %1353 = vmatpush2.bf16.msra.mxu0 0
    %1354 = vmatprep.mubr.bf16.mxu0 0
    %1355 = vmatmul.mubr.bf16.gmra.mxu0 %v1317
    %v1356 = vpop.f32.mrf.mxu0
    %v1357 = vadd.f32 0.0, %v1356
    %v1358 = vpop.f32.mrf.mxu0
    %v1359 = vpop.f32.mrf.mxu0
    %v1360 = vadd.f32 0.0, %v1359
    %v1361 = vpop.f32.mrf.mxu0
    %1362 = vdwg.mxu0
    %v1363 = vadd.f32 %v1031, %v1357
    %v1364 = vadd.f32 %v1032, %v1360
    %v1365 = vld [vmem:[%s3] sm:$0xf]
    %v1366 = vld [vmem:[%s3 + $0x4] sm:$0xf]
    %v1367 = vld [vmem:[%s3 + $0x8] sm:$0xf]
    %v1368 = vld [vmem:[%s3 + $0xc] sm:$0xf]
    %v1369 = vld [vmem:[%s4] sm:$0x1]
    %v1371 = vlaneseq
    %v1372 = vshrl.u32 %v1371, 7
    %v1373 = vsub.s32 0, %v1372
    %v1374 = vrot.slane %v1369, %v1373
    %v1380 = vunpack.c.l.b16 %v1365
    %v1381 = vunpack.c.l.b16 %v1366
    %v1382 = vunpack.c.l.b16 %v1367
    %v1383 = vunpack.c.l.b16 %v1368
    %v1384 = vpack.c.b16 %v1381, %v1380
    %v1385 = vpack.c.b16 %v1383, %v1382
    %1388 = vmatprep.subr.bf16.mxu0 0
    %1389 = vmatpush1.bf16.msra.mxu0 0
    %1390 = vmatprep.subr.bf16.mxu0 0
    %1391 = vmatpush1.bf16.msra.mxu0 0
    %1392 = vmatprep.subr.bf16.mxu0 0
    %1393 = vmatpush1.bf16.msra.mxu0 0
    %1394 = vmatprep.subr.bf16.mxu0 0
    %1395 = vmatpush1.bf16.msra.mxu0 0
    %1396 = vmatprep.subr.bf16.mxu0 0
    %1397 = vmatpush1.bf16.msra.mxu0 0
    %1398 = vmatprep.subr.bf16.mxu0 0
    %1399 = vmatpush1.bf16.msra.mxu0 0
    %1400 = vmatprep.subr.bf16.mxu0 0
    %1401 = vmatpush1.bf16.msra.mxu0 %v1385
    %1402 = vmatprep.subr.bf16.mxu0 0
    %1403 = vmatpush1.bf16.msra.mxu0 %v1384
    %1404 = vmatprep.subr.bf16.mxu0 0
    %1405 = vmatpush2.bf16.msra.mxu0 0
    %1406 = vmatprep.subr.bf16.mxu0 0
    %1407 = vmatpush2.bf16.msra.mxu0 0
    %1408 = vmatprep.subr.bf16.mxu0 0
    %1409 = vmatpush2.bf16.msra.mxu0 0
    %1410 = vmatprep.subr.bf16.mxu0 0
    %1411 = vmatpush2.bf16.msra.mxu0 0
    %1412 = vmatprep.subr.bf16.mxu0 0
    %1413 = vmatpush2.bf16.msra.mxu0 0
    %1414 = vmatprep.subr.bf16.mxu0 0
    %1415 = vmatpush2.bf16.msra.mxu0 0
    %1416 = vmatprep.subr.bf16.mxu0 0
    %1417 = vmatpush2.bf16.msra.mxu0 0
    %1418 = vmatprep.subr.bf16.mxu0 0
    %1419 = vmatpush2.bf16.msra.mxu0 0
    %1420 = vmatprep.mubr.bf16.mxu0 0
    %1421 = vmatmul.mubr.bf16.gmra.mxu0 %v55
    %v1422 = vpop.f32.mrf.mxu0
    %v1423 = vadd.f32 %v1374, %v1422
    %v1424 = vpop.f32.mrf.mxu0
    %v1425 = vpop.f32.mrf.mxu0
    %v1426 = vadd.f32 %v1374, %v1425
    %v1427 = vpop.f32.mrf.mxu0
    %1428 = vdwg.mxu0
    %v1429 = vmul.f32 %v1423, 0.5
    %v1430 = vmul.f32 %v1426, 0.5
    %v1431 = vmul.f32 %v1423, 0.70710677
    %v1432 = vmul.f32 %v1426, 0.70710677
    %v1433 = verf.f32.pop %v1431
    %v1434 = verf.f32.pop %v1432
    %v1435 = vadd.f32 %v1433, 1.0
    %v1436 = vadd.f32 %v1434, 1.0
    %v1437 = vmul.f32 %v1429, %v1435
    %v1438 = vmul.f32 %v1430, %v1436
    %v1439 = vpack.c.bf16 %v1438, %v1437
    %v1440 = vld [vmem:[%s5] sm:$0xf]
    %v1441 = vld [vmem:[%s5 + $0x4] sm:$0xf]
    %v1442 = vld [vmem:[%s5 + $0x8] sm:$0xf]
    %v1443 = vld [vmem:[%s5 + $0xc] sm:$0xf]
    %v1444 = vld [vmem:[%s5 + $0x10] sm:$0xf]
    %v1445 = vld [vmem:[%s5 + $0x14] sm:$0xf]
    %v1446 = vld [vmem:[%s5 + $0x18] sm:$0xf]
    %v1447 = vld [vmem:[%s5 + $0x1c] sm:$0xf]
    %v1456 = vunpack.c.l.b16 %v1440
    %v1457 = vunpack.c.l.b16 %v1441
    %v1458 = vunpack.c.l.b16 %v1442
    %v1459 = vunpack.c.l.b16 %v1443
    %v1460 = vunpack.c.l.b16 %v1444
    %v1461 = vunpack.c.l.b16 %v1445
    %v1462 = vunpack.c.l.b16 %v1446
    %v1463 = vunpack.c.l.b16 %v1447
    %v1464 = vpack.c.b16 %v1457, %v1456
    %v1465 = vpack.c.b16 %v1459, %v1458
    %v1466 = vpack.c.b16 %v1461, %v1460
    %v1467 = vpack.c.b16 %v1463, %v1462
    %vm1472 = vcmask 523264
    %v1474 = vsel %vm1472, %v1439, 0
    %1476 = vmatprep.subr.bf16.mxu0 0
    %1477 = vmatpush1.bf16.msra.mxu0 0
    %1478 = vmatprep.subr.bf16.mxu0 0
    %1479 = vmatpush1.bf16.msra.mxu0 0
    %1480 = vmatprep.subr.bf16.mxu0 0
    %1481 = vmatpush1.bf16.msra.mxu0 0
    %1482 = vmatprep.subr.bf16.mxu0 0
    %1483 = vmatpush1.bf16.msra.mxu0 0
    %1484 = vmatprep.subr.bf16.mxu0 0
    %1485 = vmatpush1.bf16.msra.mxu0 %v1467
    %1486 = vmatprep.subr.bf16.mxu0 0
    %1487 = vmatpush1.bf16.msra.mxu0 %v1466
    %1488 = vmatprep.subr.bf16.mxu0 0
    %1489 = vmatpush1.bf16.msra.mxu0 %v1465
    %1490 = vmatprep.subr.bf16.mxu0 0
    %1491 = vmatpush1.bf16.msra.mxu0 %v1464
    %1492 = vmatprep.subr.bf16.mxu0 0
    %1493 = vmatpush2.bf16.msra.mxu0 0
    %1494 = vmatprep.subr.bf16.mxu0 0
    %1495 = vmatpush2.bf16.msra.mxu0 0
    %1496 = vmatprep.subr.bf16.mxu0 0
    %1497 = vmatpush2.bf16.msra.mxu0 0
    %1498 = vmatprep.subr.bf16.mxu0 0
    %1499 = vmatpush2.bf16.msra.mxu0 0
    %1500 = vmatprep.subr.bf16.mxu0 0
    %1501 = vmatpush2.bf16.msra.mxu0 0
    %1502 = vmatprep.subr.bf16.mxu0 0
    %1503 = vmatpush2.bf16.msra.mxu0 0
    %1504 = vmatprep.subr.bf16.mxu0 0
    %1505 = vmatpush2.bf16.msra.mxu0 0
    %1506 = vmatprep.subr.bf16.mxu0 0
    %1507 = vmatpush2.bf16.msra.mxu0 0
    %1508 = vmatprep.mubr.bf16.mxu0 0
    %1509 = vmatmul.mubr.bf16.gmra.mxu0 %v1474
    %v1510 = vpop.f32.mrf.mxu0
    %v1511 = vadd.f32 0.0, %v1510
    %v1512 = vpop.f32.mrf.mxu0
    %v1513 = vpop.f32.mrf.mxu0
    %v1514 = vadd.f32 0.0, %v1513
    %v1515 = vpop.f32.mrf.mxu0
    %1516 = vdwg.mxu0
    %v1517 = vadd.f32 %v1363, %v1511
    %v1518 = vadd.f32 %v1364, %v1514
    %v1519 = vld [vmem:[%s6] sm:$0x1]
    %v1521 = vlaneseq
    %v1522 = vshrl.u32 %v1521, 7
    %v1523 = vsub.s32 0, %v1522
    %v1524 = vrot.slane %v1519, %v1523
    %v1526 = vadd.f32 %v1517, %v1524
    %v1527 = vadd.f32 %v1518, %v1524
    %v1528 = vadd.f32 %v34, %v1526
    %v1529 = vadd.f32 %v35, %v1527
    %v1530 = vsel %vm53, %v1528, 0.0
    %1531 = vadd.xlane.f32.xlu0 %v1530
    %v1532 = vpop.xlane.xlu0 %1531
    %v1533 = vsel %vm53, %v1529, 0.0
    %1534 = vadd.xlane.f32.xlu0 %v1533
    %v1535 = vpop.xlane.xlu0 %1534
    %v1536 = vrcp.pop 32.0
    %v1537 = vmul.f32 %v1532, %v1536
    %v1538 = vmul.f32 %v1535, %v1536
    %v1539 = vsub.f32 %v1528, %v1537
    %v1540 = vsub.f32 %v1529, %v1538
    %v1541 = vmul.f32 %v1539, %v1539
    %v1542 = vmul.f32 %v1540, %v1540
    %v1543 = vsel %vm53, %v1541, 0.0
    %1544 = vadd.xlane.f32.xlu0 %v1543
    %v1545 = vpop.xlane.xlu0 %1544
    %v1546 = vsel %vm53, %v1542, 0.0
    %1547 = vadd.xlane.f32.xlu0 %v1546
    %v1548 = vpop.xlane.xlu0 %1547
    %v1549 = vmul.f32 %v1545, %v1536
    %v1550 = vmul.f32 %v1548, %v1536
    %v1551 = vadd.f32 %v1549, 1e-05
    %v1552 = vadd.f32 %v1550, 1e-05
    %v1553 = vrsqrt.pop %v1551
    %v1554 = vrsqrt.pop %v1552
    %v1555 = vmul.f32 %v1539, %v1553
    %v1556 = vmul.f32 %v1540, %v1554
    %v1557 = vld [vmem:[%s7] sm:$0x1]
    %v1559 = vlaneseq
    %v1560 = vshrl.u32 %v1559, 7
    %v1561 = vsub.s32 0, %v1560
    %v1562 = vrot.slane %v1557, %v1561
    %v1564 = vmul.f32 %v1555, %v1562
    %v1565 = vmul.f32 %v1556, %v1562
    %v1566 = vld [vmem:[%s8] sm:$0x1]
    %v1568 = vlaneseq
    %v1569 = vshrl.u32 %v1568, 7
    %v1570 = vsub.s32 0, %v1569
    %v1571 = vrot.slane %v1566, %v1570
    %v1573 = vadd.f32 %v1564, %v1571
    %v1574 = vadd.f32 %v1565, %v1571
    %1575 = vst.msk [vmem:[#allocation2] sm:$0xff] %vm53, %v1573
    %1576 = vst.msk [vmem:[#allocation2 + $0x8] sm:$0xff] %vm53, %v1574
    // Predicated region
    $region38: #{_lambda_.1} parent=1 // pred_check
      _
    $region39: #{_lambda_.1} parent=1 // pred_check_branch
      %1578 = sbr.rel (0) target = $region41
    $region40: #{_lambda_.1} parent=1 // pred_region
      %s1580 = ssub.s32 256, 256
      %1581 = vsyncadd [#allocation3], %s1580
      %s1582 = sshll.u32 [#allocation2], 4
      %s1583 = int_to_ptr.vmem [resolvable:$true] %s1582
      %1588 = dma.vmem_to_hbm [thread:$0]  %s1583, 256, %s9, [#allocation3], 128, 128, 8
    $region41: #{_lambda_.1} parent=1 // pred_fallthru
      _
    // Predicated region
    $region42: #{_lambda_.1} parent=1 // pred_check
      _
    $region43: #{_lambda_.1} parent=1 // pred_check_branch
      %1590 = sbr.rel (0) target = $region45
    $region44: #{_lambda_.1} parent=1 // pred_region
      %1591 = dma.done [#allocation3], 256
    $region45: #{_lambda_.1} parent=1 // pred_fallthru
      _
    %1592 = vsyncpa [#allocation3], 1

</llo_original>
